<compile_context>
chip_gen: v7x
topology: tpu7x:2x2x1
jax: 0.10.0
libtpu: 0.0.40
codegen_flags: <defaults>
</compile_context>

<pallas_src>
import functools

import jax
import jax.numpy as jnp
from jax.experimental import pallas as pl
from jax.experimental.pallas import tpu as pltpu


# ------------------------------ tiling helper -------------------------------

def _tile(dim, target, align):
    """Largest tile <= target that divides `dim` and is a multiple of `align`,
    else the full dim (full-extent blocks are always legal)."""
    if dim <= target:
        return dim
    t = (target // align) * align
    while t >= align:
        if dim % t == 0:
            return t
        t -= align
    return dim


# ----------------------------- Pallas kernels -------------------------------

def _ln_linear_kernel(x_ref, g_ref, b_ref, w_ref, bias_ref, o_ref, *, eps, act):
    # y = act(LayerNorm(x) @ W + b)       (LN fused into matmul prologue)
    x = x_ref[...].astype(jnp.float32)                       # (tm, K)
    mean = jnp.mean(x, axis=-1, keepdims=True)
    var = jnp.mean(jnp.square(x - mean), axis=-1, keepdims=True)
    xn = (x - mean) * jax.lax.rsqrt(var + eps)
    xn = xn * g_ref[...] + b_ref[...]                         # (tm, K)
    y = jnp.dot(xn, w_ref[...], preferred_element_type=jnp.float32)
    y = y + bias_ref[...]
    if act == "quick_gelu":
        y = y * jax.nn.sigmoid(1.702 * y)                     # QuickGELU
    o_ref[...] = y.astype(o_ref.dtype)


def _linear_res_kernel(x_ref, w_ref, bias_ref, res_ref, o_ref, acc_ref):
    # y = res + x @ W + b, accumulated over the K grid axis.
    k = pl.program_id(2)

    @pl.when(k == 0)
    def _():
        acc_ref[...] = jnp.zeros_like(acc_ref)

    acc_ref[...] += jnp.dot(x_ref[...], w_ref[...],
                            preferred_element_type=jnp.float32)

    @pl.when(k == pl.num_programs(2) - 1)
    def _():
        o_ref[...] = (acc_ref[...] + bias_ref[...]
                      + res_ref[...].astype(jnp.float32)).astype(o_ref.dtype)


def _attn_kernel(qkv_ref, mask_ref, o_ref, *, n_head, d_head, n_batch):
    # One batch element per grid step; all heads computed here so the output
    # block (1, L, D) is lane-dense.  Q is already pre-scaled (folded into W).
    b = pl.program_id(0)
    qkv = qkv_ref[0]                                          # (L, 3D)
    D = n_head * d_head
    q = qkv[:, :D]
    k = qkv[:, D:2 * D]
    v = qkv[:, 2 * D:]

    outs = []
    for h in range(n_head):
        qh = q[:, h * d_head:(h + 1) * d_head]                # (L, Dh)
        kh = k[:, h * d_head:(h + 1) * d_head]
        vh = v[:, h * d_head:(h + 1) * d_head]
        # Reproduce attn_mask.repeat(n_head,1,1) indexing exactly:
        # mask for (batch b, head h) is attn_mask[(b*H + h) % N].
        m = mask_ref[(b * n_head + h) % n_batch]              # (L, L)
        s = jax.lax.dot_general(qh, kh, (((1,), (1,)), ((), ())),
                                preferred_element_type=jnp.float32)
        s = s + m
        s = s - jnp.max(s, axis=-1, keepdims=True)
        p = jnp.exp(s)
        p = p * pl.reciprocal(jnp.sum(p, axis=-1, keepdims=True), approx=True)
        outs.append(jnp.dot(p, vh, preferred_element_type=jnp.float32))

    o_ref[0] = jnp.concatenate(outs, axis=-1).astype(o_ref.dtype)


# ------------------------------ host wrappers --------------------------------

def ln_linear(x2d, gamma, beta, w, bias, act=None, eps=1e-5,
              tm_target=256, tn_target=512):
    """y = act(LayerNorm(x2d) @ w + bias); w is (K, Nout), gamma/beta (1, K)."""
    M, K = x2d.shape
    Nout = w.shape[1]
    tm = _tile(M, tm_target, 8)
    tn = _tile(Nout, tn_target, 128)
    grid = (M // tm, Nout // tn)
    return pl.pallas_call(
        functools.partial(_ln_linear_kernel, eps=eps, act=act),
        out_shape=jax.ShapeDtypeStruct((M, Nout), x2d.dtype),
        grid=grid,
        in_specs=[
            pl.BlockSpec((tm, K), lambda i, j: (i, 0)),
            pl.BlockSpec((1, K), lambda i, j: (0, 0)),
            pl.BlockSpec((1, K), lambda i, j: (0, 0)),
            pl.BlockSpec((K, tn), lambda i, j: (0, j)),
            pl.BlockSpec((1, tn), lambda i, j: (0, j)),
        ],
        out_specs=pl.BlockSpec((tm, tn), lambda i, j: (i, j)),
        compiler_params=pltpu.CompilerParams(
            dimension_semantics=("parallel", "parallel")),
    )(x2d, gamma, beta, w, bias)


def linear_residual(x2d, w, bias, res2d,
                    tm_target=256, tn_target=256, tk_target=512):
    """y = res2d + x2d @ w + bias; w is (K, Nout); K-tiled with f32 accumulator."""
    M, K = x2d.shape
    Nout = w.shape[1]
    tm = _tile(M, tm_target, 8)
    tn = _tile(Nout, tn_target, 128)
    tk = _tile(K, tk_target, 128)
    grid = (M // tm, Nout // tn, K // tk)
    return pl.pallas_call(
        _linear_res_kernel,
        out_shape=jax.ShapeDtypeStruct((M, Nout), x2d.dtype),
        grid=grid,
        in_specs=[
            pl.BlockSpec((tm, tk), lambda i, j, k: (i, k)),
            pl.BlockSpec((tk, tn), lambda i, j, k: (k, j)),
            pl.BlockSpec((1, tn), lambda i, j, k: (0, j)),
            pl.BlockSpec((tm, tn), lambda i, j, k: (i, j)),
        ],
        out_specs=pl.BlockSpec((tm, tn), lambda i, j, k: (i, j)),
        scratch_shapes=[pltpu.VMEM((tm, tn), jnp.float32)],
        compiler_params=pltpu.CompilerParams(
            dimension_semantics=("parallel", "parallel", "arbitrary")),
    )(x2d, w, bias, res2d)


def attention(qkv, attn_mask, n_head):
    """qkv: (N, L, 3D) batch-major; attn_mask: (Nm, L, L) additive. -> (N, L, D)."""
    N, L, threeD = qkv.shape
    D = threeD // 3
    d_head = D // n_head
    Nm = attn_mask.shape[0]
    return pl.pallas_call(
        functools.partial(_attn_kernel, n_head=n_head, d_head=d_head,
                          n_batch=Nm),
        out_shape=jax.ShapeDtypeStruct((N, L, D), qkv.dtype),
        grid=(N,),
        in_specs=[
            pl.BlockSpec((1, L, threeD), lambda b: (b, 0, 0)),
            pl.BlockSpec((Nm, L, L), lambda b: (0, 0, 0)),   # mask kept resident
        ],
        out_specs=pl.BlockSpec((1, L, D), lambda b: (b, 0, 0)),
        compiler_params=pltpu.CompilerParams(dimension_semantics=("parallel",)),
    )(qkv, attn_mask)


# ------------------------------ forward pass ---------------------------------

@functools.partial(jax.jit, static_argnums=(3,))
def transformer_forward(x, attn_mask, params, n_head):
    L, N, D = x.shape
    xb = jnp.transpose(x, (1, 0, 2))                 # (N, L, D) batch-major
    x2d = xb.reshape(N * L, D)
    for p in params:
        # LN1 fused into QKV projection (Q pre-scaled in the weights).
        qkv = ln_linear(x2d, p["ln1_g"], p["ln1_b"], p["wqkv"], p["bqkv"])
        # Multi-head attention, all heads per batch element, lane-dense output.
        attn = attention(qkv.reshape(N, L, 3 * D), attn_mask, n_head)
        # out_proj + residual add, fused.
        x2d = linear_residual(attn.reshape(N * L, D), p["wout"], p["bout"], x2d)
        # LN2 + c_fc + QuickGELU, fused.
        h = ln_linear(x2d, p["ln2_g"], p["ln2_b"], p["wfc"], p["bfc"],
                      act="quick_gelu")
        # c_proj + residual add, fused.
        x2d = linear_residual(h, p["wproj"], p["bproj"], x2d)
    return jnp.transpose(x2d.reshape(N, L, D), (1, 0, 2))


# ------------------------------ parameters -----------------------------------

def init_params(key, width, layers):
    """Raw parameters in PyTorch layout (Linear weight = (out, in))."""
    D = width
    params = []
    for i in range(layers):
        ks = jax.random.split(jax.random.fold_in(key, i), 4)
        params.append(dict(
            in_proj_w=0.02 * jax.random.normal(ks[0], (3 * D, D), jnp.float32),
            in_proj_b=jnp.zeros((3 * D,), jnp.float32),
            out_proj_w=0.02 * jax.random.normal(ks[1], (D, D), jnp.float32),
            out_proj_b=jnp.zeros((D,), jnp.float32),
            ln1_g=jnp.ones((D,), jnp.float32),
            ln1_b=jnp.zeros((D,), jnp.float32),
            fc_w=0.02 * jax.random.normal(ks[2], (4 * D, D), jnp.float32),
            fc_b=jnp.zeros((4 * D,), jnp.float32),
            proj_w=0.02 * jax.random.normal(ks[3], (D, 4 * D), jnp.float32),
            proj_b=jnp.zeros((D,), jnp.float32),
            ln2_g=jnp.ones((D,), jnp.float32),
            ln2_b=jnp.zeros((D,), jnp.float32),
        ))
    return params


def prepare_params(raw_params, n_head):
    """One-time prep: transpose weights to (in, out), fold the Dh**-0.5 Q
    scaling into the in_proj weights/bias, reshape LN params / biases to 2D."""
    prepped = []
    for p in raw_params:
        D = p["ln1_g"].shape[0]
        d_head = D // n_head
        scale = d_head ** -0.5
        in_w = p["in_proj_w"].at[:D].multiply(scale)     # scale Q rows
        in_b = p["in_proj_b"].at[:D].multiply(scale)
        prepped.append(dict(
            ln1_g=p["ln1_g"].reshape(1, D),
            ln1_b=p["ln1_b"].reshape(1, D),
            ln2_g=p["ln2_g"].reshape(1, D),
            ln2_b=p["ln2_b"].reshape(1, D),
            wqkv=jnp.transpose(in_w),                    # (D, 3D)
            bqkv=in_b.reshape(1, 3 * D),
            wout=jnp.transpose(p["out_proj_w"]),         # (D, D)
            bout=p["out_proj_b"].reshape(1, D),
            wfc=jnp.transpose(p["fc_w"]),                # (D, 4D)
            bfc=p["fc_b"].reshape(1, 4 * D),
            wproj=jnp.transpose(p["proj_w"]),            # (4D, D)
            bproj=p["proj_b"].reshape(1, D),
        ))
    return prepped


# ----------------------------------- main -------------------------------------

if __name__ == "__main__":
    # Transformer(width=32, layers=2, heads=4); seq=8, batch=2.
    L, N, D, H, LAYERS = 8, 2, 32, 4, 2

    key = jax.random.PRNGKey(0)
    kx, km, kp = jax.random.split(key, 3)

    x = jax.random.normal(kx, (L, N, D), dtype=jnp.float32)
    # Additive float attention mask (0 = attend, -1e6 = masked), shape (N, L, L).
    keep = (jax.random.uniform(km, (N, L, L)) > 0.1).astype(jnp.float32)
    attn_mask = (1.0 - keep) * (-1e6)

    raw_params = init_params(kp, D, LAYERS)
    params = prepare_params(raw_params, H)

    out = transformer_forward(x, attn_mask, params, H)
    jax.block_until_ready(out)
    assert out.shape == (L, N, D)
    print("KERNEL_OK")
</pallas_src>

<mosaic_0001>
module attributes {stable_mosaic.version = 11 : i64} {
  func.func @_linear_res_kernel(%arg0: i32, %arg1: i32, %arg2: i32, %arg3: memref<16x32xf32, #tpu.memory_space<vmem>>, %arg4: memref<32x32xf32, #tpu.memory_space<vmem>>, %arg5: memref<1x32xf32, #tpu.memory_space<vmem>>, %arg6: memref<16x32xf32, #tpu.memory_space<vmem>>, %arg7: memref<16x32xf32, #tpu.memory_space<vmem>>, %arg8: memref<16x32xf32, #tpu.memory_space<vmem>>) attributes {dimension_semantics = [#tpu.dimension_semantics<parallel>, #tpu.dimension_semantics<parallel>, #tpu.dimension_semantics<arbitrary>], iteration_bounds = array<i64: 1, 1, 1>, scalar_prefetch = 0 : i64, scratch_operands = 1 : i64, tpu.core_type = #tpu.core_type<tc>, window_params = [{transform_indices = @transform_0, window_bounds = array<i64: 16, 32>}, {transform_indices = @transform_1, window_bounds = array<i64: 32, 32>}, {transform_indices = @transform_2, window_bounds = array<i64: 1, 32>}, {transform_indices = @transform_3, window_bounds = array<i64: 16, 32>}, {transform_indices = @transform_4, window_bounds = array<i64: 16, 32>}]} {
    %c0_i32 = arith.constant 0 : i32
    %0 = arith.cmpi eq, %arg2, %c0_i32 : i32
    %1 = arith.extui %0 : i1 to i32
    %c0_i32_0 = arith.constant 0 : i32
    %2 = arith.cmpi ne, %1, %c0_i32_0 : i32
    scf.if %2 {
      %cst_10 = arith.constant 0.000000e+00 : f32
      %12 = vector.broadcast %cst_10 : f32 to vector<16x32xf32>
      %c0_11 = arith.constant 0 : index
      %c0_12 = arith.constant 0 : index
      %13 = vector.load %arg8[%c0_11, %c0_12] : memref<16x32xf32, #tpu.memory_space<vmem>>, vector<16x32xf32>
      tpu.vector_store %arg8[%c0_11, %c0_12], %12 {strides = array<i32>} : memref<16x32xf32, #tpu.memory_space<vmem>>, vector<16x32xf32>,
    } else {
    }
    %c0 = arith.constant 0 : index
    %c0_1 = arith.constant 0 : index
    %3 = vector.load %arg8[%c0, %c0_1] : memref<16x32xf32, #tpu.memory_space<vmem>>, vector<16x32xf32>
    %c0_2 = arith.constant 0 : index
    %c0_3 = arith.constant 0 : index
    %4 = vector.load %arg3[%c0_2, %c0_3] : memref<16x32xf32, #tpu.memory_space<vmem>>, vector<16x32xf32>
    %c0_4 = arith.constant 0 : index
    %c0_5 = arith.constant 0 : index
    %5 = vector.load %arg4[%c0_4, %c0_5] : memref<32x32xf32, #tpu.memory_space<vmem>>, vector<32x32xf32>
    %cst = arith.constant dense<0.000000e+00> : vector<16x32xf32>
    %6 = tpu.matmul %4, %5, %cst {dimension_numbers = #tpu.dot_dimension_numbers<[1], [0], [0], [1], [0, 0, 1, 1], [], []>} : vector<16x32xf32>, vector<32x32xf32>, vector<16x32xf32> -> vector<16x32xf32>
    %7 = arith.addf %3, %6 : vector<16x32xf32>
    %c0_6 = arith.constant 0 : index
    %c0_7 = arith.constant 0 : index
    %8 = vector.load %arg8[%c0_6, %c0_7] : memref<16x32xf32, #tpu.memory_space<vmem>>, vector<16x32xf32>
    tpu.vector_store %arg8[%c0_6, %c0_7], %7 {strides = array<i32>} : memref<16x32xf32, #tpu.memory_space<vmem>>, vector<16x32xf32>,
    %c0_i32_8 = arith.constant 0 : i32
    %9 = arith.cmpi eq, %arg2, %c0_i32_8 : i32
    %10 = arith.extui %9 : i1 to i32
    %c0_i32_9 = arith.constant 0 : i32
    %11 = arith.cmpi ne, %10, %c0_i32_9 : i32
    scf.if %11 {
      %c0_10 = arith.constant 0 : index
      %c0_11 = arith.constant 0 : index
      %12 = vector.load %arg8[%c0_10, %c0_11] : memref<16x32xf32, #tpu.memory_space<vmem>>, vector<16x32xf32>
      %c0_12 = arith.constant 0 : index
      %c0_13 = arith.constant 0 : index
      %13 = vector.load %arg5[%c0_12, %c0_13] : memref<1x32xf32, #tpu.memory_space<vmem>>, vector<1x32xf32>
      %14 = vector.broadcast %13 : vector<1x32xf32> to vector<16x32xf32>
      %15 = arith.addf %12, %14 : vector<16x32xf32>
      %c0_14 = arith.constant 0 : index
      %c0_15 = arith.constant 0 : index
      %16 = vector.load %arg6[%c0_14, %c0_15] : memref<16x32xf32, #tpu.memory_space<vmem>>, vector<16x32xf32>
      %17 = arith.addf %15, %16 : vector<16x32xf32>
      %c0_16 = arith.constant 0 : index
      %c0_17 = arith.constant 0 : index
      %18 = vector.load %arg7[%c0_16, %c0_17] : memref<16x32xf32, #tpu.memory_space<vmem>>, vector<16x32xf32>
      tpu.vector_store %arg7[%c0_16, %c0_17], %17 {strides = array<i32>} : memref<16x32xf32, #tpu.memory_space<vmem>>, vector<16x32xf32>,
    } else {
    }
    return
  }
  func.func @transform_0(%arg0: i32, %arg1: i32, %arg2: i32) -> (i32, i32) {
    %c0_i32 = arith.constant 0 : i32
    return %arg0, %arg2 : i32, i32
  }
  func.func @transform_1(%arg0: i32, %arg1: i32, %arg2: i32) -> (i32, i32) {
    %c0_i32 = arith.constant 0 : i32
    return %arg2, %arg1 : i32, i32
  }
  func.func @transform_2(%arg0: i32, %arg1: i32, %arg2: i32) -> (i32, i32) {
    %c0_i32 = arith.constant 0 : i32
    %c0_i32_0 = arith.constant 0 : i32
    return %c0_i32, %arg1 : i32, i32
  }
  func.func @transform_3(%arg0: i32, %arg1: i32, %arg2: i32) -> (i32, i32) {
    %c0_i32 = arith.constant 0 : i32
    return %arg0, %arg1 : i32, i32
  }
  func.func @transform_4(%arg0: i32, %arg1: i32, %arg2: i32) -> (i32, i32) {
    %c0_i32 = arith.constant 0 : i32
    return %arg0, %arg1 : i32, i32
  }
}

module attributes {stable_mosaic.version = 11 : i64} {
  func.func @_ln_linear_kernel(%arg0: i32, %arg1: i32, %arg2: memref<16x32xf32, #tpu.memory_space<vmem>>, %arg3: memref<1x32xf32, #tpu.memory_space<vmem>>, %arg4: memref<1x32xf32, #tpu.memory_space<vmem>>, %arg5: memref<32x96xf32, #tpu.memory_space<vmem>>, %arg6: memref<1x96xf32, #tpu.memory_space<vmem>>, %arg7: memref<16x96xf32, #tpu.memory_space<vmem>>) attributes {dimension_semantics = [#tpu.dimension_semantics<parallel>, #tpu.dimension_semantics<parallel>], iteration_bounds = array<i64: 1, 1>, scalar_prefetch = 0 : i64, scratch_operands = 0 : i64, tpu.core_type = #tpu.core_type<tc>, window_params = [{transform_indices = @transform_0, window_bounds = array<i64: 16, 32>}, {pipeline_mode = #tpu.pipeline_mode<synchronous>, transform_indices = @transform_1, window_bounds = array<i64: 1, 32>}, {pipeline_mode = #tpu.pipeline_mode<synchronous>, transform_indices = @transform_2, window_bounds = array<i64: 1, 32>}, {transform_indices = @transform_3, window_bounds = array<i64: 32, 96>}, {transform_indices = @transform_4, window_bounds = array<i64: 1, 96>}, {transform_indices = @transform_5, window_bounds = array<i64: 16, 96>}]} {
    %c0 = arith.constant 0 : index
    %c0_0 = arith.constant 0 : index
    %0 = vector.load %arg2[%c0, %c0_0] : memref<16x32xf32, #tpu.memory_space<vmem>>, vector<16x32xf32>
    %cst = arith.constant dense<0.000000e+00> : vector<16xf32>
    %1 = vector.multi_reduction <add>, %0, %cst [1] : vector<16x32xf32> to vector<16xf32>
    %2 = vector.shape_cast %1 : vector<16xf32> to vector<16x1xf32>
    %cst_1 = arith.constant 3.200000e+01 : f32
    %3 = vector.broadcast %cst_1 : f32 to vector<16x1xf32>
    %4 = arith.divf %2, %3 : vector<16x1xf32>
    %5 = vector.broadcast %4 : vector<16x1xf32> to vector<16x32xf32>
    %6 = arith.subf %0, %5 : vector<16x32xf32>
    %7 = arith.mulf %6, %6 : vector<16x32xf32>
    %cst_2 = arith.constant dense<0.000000e+00> : vector<16xf32>
    %8 = vector.multi_reduction <add>, %7, %cst_2 [1] : vector<16x32xf32> to vector<16xf32>
    %9 = vector.shape_cast %8 : vector<16xf32> to vector<16x1xf32>
    %cst_3 = arith.constant 3.200000e+01 : f32
    %10 = vector.broadcast %cst_3 : f32 to vector<16x1xf32>
    %11 = arith.divf %9, %10 : vector<16x1xf32>
    %12 = vector.broadcast %4 : vector<16x1xf32> to vector<16x32xf32>
    %13 = arith.subf %0, %12 : vector<16x32xf32>
    %cst_4 = arith.constant 9.99999974E-6 : f32
    %14 = vector.broadcast %cst_4 : f32 to vector<16x1xf32>
    %15 = arith.addf %11, %14 : vector<16x1xf32>
    %16 = math.rsqrt %15 : vector<16x1xf32>
    %17 = vector.broadcast %16 : vector<16x1xf32> to vector<16x32xf32>
    %18 = arith.mulf %13, %17 : vector<16x32xf32>
    %c0_5 = arith.constant 0 : index
    %c0_6 = arith.constant 0 : index
    %19 = vector.load %arg3[%c0_5, %c0_6] : memref<1x32xf32, #tpu.memory_space<vmem>>, vector<1x32xf32>
    %20 = vector.broadcast %19 : vector<1x32xf32> to vector<16x32xf32>
    %21 = arith.mulf %18, %20 : vector<16x32xf32>
    %c0_7 = arith.constant 0 : index
    %c0_8 = arith.constant 0 : index
    %22 = vector.load %arg4[%c0_7, %c0_8] : memref<1x32xf32, #tpu.memory_space<vmem>>, vector<1x32xf32>
    %23 = vector.broadcast %22 : vector<1x32xf32> to vector<16x32xf32>
    %24 = arith.addf %21, %23 : vector<16x32xf32>
    %c0_9 = arith.constant 0 : index
    %c0_10 = arith.constant 0 : index
    %25 = vector.load %arg5[%c0_9, %c0_10] : memref<32x96xf32, #tpu.memory_space<vmem>>, vector<32x96xf32>
    %cst_11 = arith.constant dense<0.000000e+00> : vector<16x96xf32>
    %26 = tpu.matmul %24, %25, %cst_11 {dimension_numbers = #tpu.dot_dimension_numbers<[1], [0], [0], [1], [0, 0, 1, 1], [], []>} : vector<16x32xf32>, vector<32x96xf32>, vector<16x96xf32> -> vector<16x96xf32>
    %c0_12 = arith.constant 0 : index
    %c0_13 = arith.constant 0 : index
    %27 = vector.load %arg6[%c0_12, %c0_13] : memref<1x96xf32, #tpu.memory_space<vmem>>, vector<1x96xf32>
    %28 = vector.broadcast %27 : vector<1x96xf32> to vector<16x96xf32>
    %29 = arith.addf %26, %28 : vector<16x96xf32>
    %c0_14 = arith.constant 0 : index
    %c0_15 = arith.constant 0 : index
    %30 = vector.load %arg7[%c0_14, %c0_15] : memref<16x96xf32, #tpu.memory_space<vmem>>, vector<16x96xf32>
    tpu.vector_store %arg7[%c0_14, %c0_15], %29 {strides = array<i32>} : memref<16x96xf32, #tpu.memory_space<vmem>>, vector<16x96xf32>,
    return
  }
  func.func @transform_0(%arg0: i32, %arg1: i32) -> (i32, i32) {
    %c0_i32 = arith.constant 0 : i32
    %c0_i32_0 = arith.constant 0 : i32
    return %arg0, %c0_i32 : i32, i32
  }
  func.func @transform_1(%arg0: i32, %arg1: i32) -> (i32, i32) {
    %c0_i32 = arith.constant 0 : i32
    %c0_i32_0 = arith.constant 0 : i32
    %c0_i32_1 = arith.constant 0 : i32
    return %c0_i32, %c0_i32_0 : i32, i32
  }
  func.func @transform_2(%arg0: i32, %arg1: i32) -> (i32, i32) {
    %c0_i32 = arith.constant 0 : i32
    %c0_i32_0 = arith.constant 0 : i32
    %c0_i32_1 = arith.constant 0 : i32
    return %c0_i32, %c0_i32_0 : i32, i32
  }
  func.func @transform_3(%arg0: i32, %arg1: i32) -> (i32, i32) {
    %c0_i32 = arith.constant 0 : i32
    %c0_i32_0 = arith.constant 0 : i32
    return %c0_i32, %arg1 : i32, i32
  }
  func.func @transform_4(%arg0: i32, %arg1: i32) -> (i32, i32) {
    %c0_i32 = arith.constant 0 : i32
    %c0_i32_0 = arith.constant 0 : i32
    return %c0_i32, %arg1 : i32, i32
  }
  func.func @transform_5(%arg0: i32, %arg1: i32) -> (i32, i32) {
    %c0_i32 = arith.constant 0 : i32
    return %arg0, %arg1 : i32, i32
  }
}

module attributes {stable_mosaic.version = 11 : i64} {
  func.func @_attn_kernel(%arg0: i32, %arg1: memref<1x8x96xf32, #tpu.memory_space<vmem>>, %arg2: memref<2x8x8xf32, #tpu.memory_space<vmem>>, %arg3: memref<1x8x32xf32, #tpu.memory_space<vmem>>) attributes {dimension_semantics = [#tpu.dimension_semantics<parallel>], iteration_bounds = array<i64: 2>, scalar_prefetch = 0 : i64, scratch_operands = 0 : i64, tpu.core_type = #tpu.core_type<tc>, window_params = [{transform_indices = @transform_0, window_bounds = array<i64: 1, 8, 96>}, {pipeline_mode = #tpu.pipeline_mode<synchronous>, transform_indices = @transform_1, window_bounds = array<i64: 2, 8, 8>}, {transform_indices = @transform_2, window_bounds = array<i64: 1, 8, 32>}]} {
    %c0 = arith.constant 0 : index
    %c0_0 = arith.constant 0 : index
    %c0_1 = arith.constant 0 : index
    %0 = vector.load %arg1[%c0, %c0_0, %c0_1] : memref<1x8x96xf32, #tpu.memory_space<vmem>>, vector<1x8x96xf32>
    %1 = vector.shape_cast %0 : vector<1x8x96xf32> to vector<8x96xf32>
    %2 = vector.extract_strided_slice %1 {offsets = [0, 0], sizes = [8, 32], strides = [1, 1]} : vector<8x96xf32> to vector<8x32xf32>
    %3 = vector.extract_strided_slice %1 {offsets = [0, 32], sizes = [8, 32], strides = [1, 1]} : vector<8x96xf32> to vector<8x32xf32>
    %4 = vector.extract_strided_slice %1 {offsets = [0, 64], sizes = [8, 32], strides = [1, 1]} : vector<8x96xf32> to vector<8x32xf32>
    %5 = vector.extract_strided_slice %2 {offsets = [0, 0], sizes = [8, 8], strides = [1, 1]} : vector<8x32xf32> to vector<8x8xf32>
    %6 = vector.extract_strided_slice %3 {offsets = [0, 0], sizes = [8, 8], strides = [1, 1]} : vector<8x32xf32> to vector<8x8xf32>
    %7 = vector.extract_strided_slice %4 {offsets = [0, 0], sizes = [8, 8], strides = [1, 1]} : vector<8x32xf32> to vector<8x8xf32>
    %c4_i32 = arith.constant 4 : i32
    %8 = arith.muli %arg0, %c4_i32 : i32
    %c0_i32 = arith.constant 0 : i32
    %9 = arith.addi %8, %c0_i32 : i32
    %c2_i32 = arith.constant 2 : i32
    %c0_i32_2 = arith.constant 0 : i32
    %10 = arith.cmpi eq, %c2_i32, %c0_i32_2 : i32
    %c1_i32 = arith.constant 1 : i32
    %11 = arith.select %10, %c1_i32, %c2_i32 : i32
    %12 = arith.remsi %9, %11 : i32
    %c0_i32_3 = arith.constant 0 : i32
    %13 = arith.cmpi ne, %12, %c0_i32_3 : i32
    %c0_i32_4 = arith.constant 0 : i32
    %14 = arith.cmpi slt, %12, %c0_i32_4 : i32
    %c0_i32_5 = arith.constant 0 : i32
    %15 = arith.cmpi slt, %11, %c0_i32_5 : i32
    %16 = arith.xori %14, %15 : i1
    %17 = arith.andi %16, %13 : i1
    %18 = arith.addi %12, %11 : i32
    %19 = arith.select %17, %18, %12 : i32
    %20 = arith.index_cast %19 : i32 to index
    %c0_6 = arith.constant 0 : index
    %c0_7 = arith.constant 0 : index
    %21 = vector.load %arg2[%20, %c0_6, %c0_7] : memref<2x8x8xf32, #tpu.memory_space<vmem>>, vector<1x8x8xf32>
    %22 = vector.shape_cast %21 : vector<1x8x8xf32> to vector<8x8xf32>
    %cst = arith.constant dense<0.000000e+00> : vector<8x8xf32>
    %23 = tpu.matmul %5, %6, %cst {dimension_numbers = #tpu.dot_dimension_numbers<[1], [1], [0], [0], [0, 0, 1, 0], [], []>} : vector<8x8xf32>, vector<8x8xf32>, vector<8x8xf32> -> vector<8x8xf32>
    %24 = arith.addf %23, %22 : vector<8x8xf32>
    %cst_8 = arith.constant dense<0xFF800000> : vector<8xf32>
    %25 = vector.multi_reduction <maximumf>, %24, %cst_8 [1] : vector<8x8xf32> to vector<8xf32>
    %26 = vector.shape_cast %25 : vector<8xf32> to vector<8x1xf32>
    %27 = vector.broadcast %26 : vector<8x1xf32> to vector<8x8xf32>
    %28 = arith.subf %24, %27 : vector<8x8xf32>
    %29 = math.exp %28 : vector<8x8xf32>
    %cst_9 = arith.constant dense<0.000000e+00> : vector<8xf32>
    %30 = vector.multi_reduction <add>, %29, %cst_9 [1] : vector<8x8xf32> to vector<8xf32>
    %31 = vector.shape_cast %30 : vector<8xf32> to vector<8x1xf32>
    %32 = tpu.reciprocal %31 {approx = true} : vector<8x1xf32> -> vector<8x1xf32>
    %33 = vector.broadcast %32 : vector<8x1xf32> to vector<8x8xf32>
    %34 = arith.mulf %29, %33 : vector<8x8xf32>
    %cst_10 = arith.constant dense<0.000000e+00> : vector<8x8xf32>
    %35 = tpu.matmul %34, %7, %cst_10 {dimension_numbers = #tpu.dot_dimension_numbers<[1], [0], [0], [1], [0, 0, 1, 1], [], []>} : vector<8x8xf32>, vector<8x8xf32>, vector<8x8xf32> -> vector<8x8xf32>
    %36 = vector.extract_strided_slice %2 {offsets = [0, 8], sizes = [8, 8], strides = [1, 1]} : vector<8x32xf32> to vector<8x8xf32>
    %37 = vector.extract_strided_slice %3 {offsets = [0, 8], sizes = [8, 8], strides = [1, 1]} : vector<8x32xf32> to vector<8x8xf32>
    %38 = vector.extract_strided_slice %4 {offsets = [0, 8], sizes = [8, 8], strides = [1, 1]} : vector<8x32xf32> to vector<8x8xf32>
    %c4_i32_11 = arith.constant 4 : i32
    %39 = arith.muli %arg0, %c4_i32_11 : i32
    %c1_i32_12 = arith.constant 1 : i32
    %40 = arith.addi %39, %c1_i32_12 : i32
    %c2_i32_13 = arith.constant 2 : i32
    %c0_i32_14 = arith.constant 0 : i32
    %41 = arith.cmpi eq, %c2_i32_13, %c0_i32_14 : i32
    %c1_i32_15 = arith.constant 1 : i32
    %42 = arith.select %41, %c1_i32_15, %c2_i32_13 : i32
    %43 = arith.remsi %40, %42 : i32
    %c0_i32_16 = arith.constant 0 : i32
    %44 = arith.cmpi ne, %43, %c0_i32_16 : i32
    %c0_i32_17 = arith.constant 0 : i32
    %45 = arith.cmpi slt, %43, %c0_i32_17 : i32
    %c0_i32_18 = arith.constant 0 : i32
    %46 = arith.cmpi slt, %42, %c0_i32_18 : i32
    %47 = arith.xori %45, %46 : i1
    %48 = arith.andi %47, %44 : i1
    %49 = arith.addi %43, %42 : i32
    %50 = arith.select %48, %49, %43 : i32
    %51 = arith.index_cast %50 : i32 to index
    %c0_19 = arith.constant 0 : index
    %c0_20 = arith.constant 0 : index
    %52 = vector.load %arg2[%51, %c0_19, %c0_20] : memref<2x8x8xf32, #tpu.memory_space<vmem>>, vector<1x8x8xf32>
    %53 = vector.shape_cast %52 : vector<1x8x8xf32> to vector<8x8xf32>
    %cst_21 = arith.constant dense<0.000000e+00> : vector<8x8xf32>
    %54 = tpu.matmul %36, %37, %cst_21 {dimension_numbers = #tpu.dot_dimension_numbers<[1], [1], [0], [0], [0, 0, 1, 0], [], []>} : vector<8x8xf32>, vector<8x8xf32>, vector<8x8xf32> -> vector<8x8xf32>
    %55 = arith.addf %54, %53 : vector<8x8xf32>
    %cst_22 = arith.constant dense<0xFF800000> : vector<8xf32>
    %56 = vector.multi_reduction <maximumf>, %55, %cst_22 [1] : vector<8x8xf32> to vector<8xf32>
    %57 = vector.shape_cast %56 : vector<8xf32> to vector<8x1xf32>
    %58 = vector.broadcast %57 : vector<8x1xf32> to vector<8x8xf32>
    %59 = arith.subf %55, %58 : vector<8x8xf32>
    %60 = math.exp %59 : vector<8x8xf32>
    %cst_23 = arith.constant dense<0.000000e+00> : vector<8xf32>
    %61 = vector.multi_reduction <add>, %60, %cst_23 [1] : vector<8x8xf32> to vector<8xf32>
    %62 = vector.shape_cast %61 : vector<8xf32> to vector<8x1xf32>
    %63 = tpu.reciprocal %62 {approx = true} : vector<8x1xf32> -> vector<8x1xf32>
    %64 = vector.broadcast %63 : vector<8x1xf32> to vector<8x8xf32>
    %65 = arith.mulf %60, %64 : vector<8x8xf32>
    %cst_24 = arith.constant dense<0.000000e+00> : vector<8x8xf32>
    %66 = tpu.matmul %65, %38, %cst_24 {dimension_numbers = #tpu.dot_dimension_numbers<[1], [0], [0], [1], [0, 0, 1, 1], [], []>} : vector<8x8xf32>, vector<8x8xf32>, vector<8x8xf32> -> vector<8x8xf32>
    %67 = vector.extract_strided_slice %2 {offsets = [0, 16], sizes = [8, 8], strides = [1, 1]} : vector<8x32xf32> to vector<8x8xf32>
    %68 = vector.extract_strided_slice %3 {offsets = [0, 16], sizes = [8, 8], strides = [1, 1]} : vector<8x32xf32> to vector<8x8xf32>
    %69 = vector.extract_strided_slice %4 {offsets = [0, 16], sizes = [8, 8], strides = [1, 1]} : vector<8x32xf32> to vector<8x8xf32>
    %c4_i32_25 = arith.constant 4 : i32
    %70 = arith.muli %arg0, %c4_i32_25 : i32
    %c2_i32_26 = arith.constant 2 : i32
    %71 = arith.addi %70, %c2_i32_26 : i32
    %c2_i32_27 = arith.constant 2 : i32
    %c0_i32_28 = arith.constant 0 : i32
    %72 = arith.cmpi eq, %c2_i32_27, %c0_i32_28 : i32
    %c1_i32_29 = arith.constant 1 : i32
    %73 = arith.select %72, %c1_i32_29, %c2_i32_27 : i32
    %74 = arith.remsi %71, %73 : i32
    %c0_i32_30 = arith.constant 0 : i32
    %75 = arith.cmpi ne, %74, %c0_i32_30 : i32
    %c0_i32_31 = arith.constant 0 : i32
    %76 = arith.cmpi slt, %74, %c0_i32_31 : i32
    %c0_i32_32 = arith.constant 0 : i32
    %77 = arith.cmpi slt, %73, %c0_i32_32 : i32
    %78 = arith.xori %76, %77 : i1
    %79 = arith.andi %78, %75 : i1
    %80 = arith.addi %74, %73 : i32
    %81 = arith.select %79, %80, %74 : i32
    %82 = arith.index_cast %81 : i32 to index
    %c0_33 = arith.constant 0 : index
    %c0_34 = arith.constant 0 : index
    %83 = vector.load %arg2[%82, %c0_33, %c0_34] : memref<2x8x8xf32, #tpu.memory_space<vmem>>, vector<1x8x8xf32>
    %84 = vector.shape_cast %83 : vector<1x8x8xf32> to vector<8x8xf32>
    %cst_35 = arith.constant dense<0.000000e+00> : vector<8x8xf32>
    %85 = tpu.matmul %67, %68, %cst_35 {dimension_numbers = #tpu.dot_dimension_numbers<[1], [1], [0], [0], [0, 0, 1, 0], [], []>} : vector<8x8xf32>, vector<8x8xf32>, vector<8x8xf32> -> vector<8x8xf32>
    %86 = arith.addf %85, %84 : vector<8x8xf32>
    %cst_36 = arith.constant dense<0xFF800000> : vector<8xf32>
    %87 = vector.multi_reduction <maximumf>, %86, %cst_36 [1] : vector<8x8xf32> to vector<8xf32>
    %88 = vector.shape_cast %87 : vector<8xf32> to vector<8x1xf32>
    %89 = vector.broadcast %88 : vector<8x1xf32> to vector<8x8xf32>
    %90 = arith.subf %86, %89 : vector<8x8xf32>
    %91 = math.exp %90 : vector<8x8xf32>
    %cst_37 = arith.constant dense<0.000000e+00> : vector<8xf32>
    %92 = vector.multi_reduction <add>, %91, %cst_37 [1] : vector<8x8xf32> to vector<8xf32>
    %93 = vector.shape_cast %92 : vector<8xf32> to vector<8x1xf32>
    %94 = tpu.reciprocal %93 {approx = true} : vector<8x1xf32> -> vector<8x1xf32>
    %95 = vector.broadcast %94 : vector<8x1xf32> to vector<8x8xf32>
    %96 = arith.mulf %91, %95 : vector<8x8xf32>
    %cst_38 = arith.constant dense<0.000000e+00> : vector<8x8xf32>
    %97 = tpu.matmul %96, %69, %cst_38 {dimension_numbers = #tpu.dot_dimension_numbers<[1], [0], [0], [1], [0, 0, 1, 1], [], []>} : vector<8x8xf32>, vector<8x8xf32>, vector<8x8xf32> -> vector<8x8xf32>
    %98 = vector.extract_strided_slice %2 {offsets = [0, 24], sizes = [8, 8], strides = [1, 1]} : vector<8x32xf32> to vector<8x8xf32>
    %99 = vector.extract_strided_slice %3 {offsets = [0, 24], sizes = [8, 8], strides = [1, 1]} : vector<8x32xf32> to vector<8x8xf32>
    %100 = vector.extract_strided_slice %4 {offsets = [0, 24], sizes = [8, 8], strides = [1, 1]} : vector<8x32xf32> to vector<8x8xf32>
    %c4_i32_39 = arith.constant 4 : i32
    %101 = arith.muli %arg0, %c4_i32_39 : i32
    %c3_i32 = arith.constant 3 : i32
    %102 = arith.addi %101, %c3_i32 : i32
    %c2_i32_40 = arith.constant 2 : i32
    %c0_i32_41 = arith.constant 0 : i32
    %103 = arith.cmpi eq, %c2_i32_40, %c0_i32_41 : i32
    %c1_i32_42 = arith.constant 1 : i32
    %104 = arith.select %103, %c1_i32_42, %c2_i32_40 : i32
    %105 = arith.remsi %102, %104 : i32
    %c0_i32_43 = arith.constant 0 : i32
    %106 = arith.cmpi ne, %105, %c0_i32_43 : i32
    %c0_i32_44 = arith.constant 0 : i32
    %107 = arith.cmpi slt, %105, %c0_i32_44 : i32
    %c0_i32_45 = arith.constant 0 : i32
    %108 = arith.cmpi slt, %104, %c0_i32_45 : i32
    %109 = arith.xori %107, %108 : i1
    %110 = arith.andi %109, %106 : i1
    %111 = arith.addi %105, %104 : i32
    %112 = arith.select %110, %111, %105 : i32
    %113 = arith.index_cast %112 : i32 to index
    %c0_46 = arith.constant 0 : index
    %c0_47 = arith.constant 0 : index
    %114 = vector.load %arg2[%113, %c0_46, %c0_47] : memref<2x8x8xf32, #tpu.memory_space<vmem>>, vector<1x8x8xf32>
    %115 = vector.shape_cast %114 : vector<1x8x8xf32> to vector<8x8xf32>
    %cst_48 = arith.constant dense<0.000000e+00> : vector<8x8xf32>
    %116 = tpu.matmul %98, %99, %cst_48 {dimension_numbers = #tpu.dot_dimension_numbers<[1], [1], [0], [0], [0, 0, 1, 0], [], []>} : vector<8x8xf32>, vector<8x8xf32>, vector<8x8xf32> -> vector<8x8xf32>
    %117 = arith.addf %116, %115 : vector<8x8xf32>
    %cst_49 = arith.constant dense<0xFF800000> : vector<8xf32>
    %118 = vector.multi_reduction <maximumf>, %117, %cst_49 [1] : vector<8x8xf32> to vector<8xf32>
    %119 = vector.shape_cast %118 : vector<8xf32> to vector<8x1xf32>
    %120 = vector.broadcast %119 : vector<8x1xf32> to vector<8x8xf32>
    %121 = arith.subf %117, %120 : vector<8x8xf32>
    %122 = math.exp %121 : vector<8x8xf32>
    %cst_50 = arith.constant dense<0.000000e+00> : vector<8xf32>
    %123 = vector.multi_reduction <add>, %122, %cst_50 [1] : vector<8x8xf32> to vector<8xf32>
    %124 = vector.shape_cast %123 : vector<8xf32> to vector<8x1xf32>
    %125 = tpu.reciprocal %124 {approx = true} : vector<8x1xf32> -> vector<8x1xf32>
    %126 = vector.broadcast %125 : vector<8x1xf32> to vector<8x8xf32>
    %127 = arith.mulf %122, %126 : vector<8x8xf32>
    %cst_51 = arith.constant dense<0.000000e+00> : vector<8x8xf32>
    %128 = tpu.matmul %127, %100, %cst_51 {dimension_numbers = #tpu.dot_dimension_numbers<[1], [0], [0], [1], [0, 0, 1, 1], [], []>} : vector<8x8xf32>, vector<8x8xf32>, vector<8x8xf32> -> vector<8x8xf32>
    %129 = tpu.concatenate %35, %66, %97, %128 in 1 : vector<8x8xf32>, vector<8x8xf32>, vector<8x8xf32>, vector<8x8xf32> -> vector<8x32xf32>
    %c0_52 = arith.constant 0 : index
    %c0_53 = arith.constant 0 : index
    %c0_54 = arith.constant 0 : index
    %130 = vector.load %arg3[%c0_52, %c0_53, %c0_54] : memref<1x8x32xf32, #tpu.memory_space<vmem>>, vector<1x8x32xf32>
    %131 = vector.shape_cast %130 : vector<1x8x32xf32> to vector<8x32xf32>
    %132 = vector.shape_cast %129 : vector<8x32xf32> to vector<1x8x32xf32>
    tpu.vector_store %arg3[%c0_52, %c0_53, %c0_54], %132 {strides = array<i32>} : memref<1x8x32xf32, #tpu.memory_space<vmem>>, vector<1x8x32xf32>,
    return
  }
  func.func @transform_0(%arg0: i32) -> (i32, i32, i32) {
    %c0_i32 = arith.constant 0 : i32
    %c0_i32_0 = arith.constant 0 : i32
    %c0_i32_1 = arith.constant 0 : i32
    return %arg0, %c0_i32, %c0_i32_0 : i32, i32, i32
  }
  func.func @transform_1(%arg0: i32) -> (i32, i32, i32) {
    %c0_i32 = arith.constant 0 : i32
    %c0_i32_0 = arith.constant 0 : i32
    %c0_i32_1 = arith.constant 0 : i32
    %c0_i32_2 = arith.constant 0 : i32
    return %c0_i32, %c0_i32_0, %c0_i32_1 : i32, i32, i32
  }
  func.func @transform_2(%arg0: i32) -> (i32, i32, i32) {
    %c0_i32 = arith.constant 0 : i32
    %c0_i32_0 = arith.constant 0 : i32
    %c0_i32_1 = arith.constant 0 : i32
    return %arg0, %c0_i32, %c0_i32_0 : i32, i32, i32
  }
}

module attributes {stable_mosaic.version = 11 : i64} {
  func.func @_ln_linear_kernel(%arg0: i32, %arg1: i32, %arg2: memref<16x32xf32, #tpu.memory_space<vmem>>, %arg3: memref<1x32xf32, #tpu.memory_space<vmem>>, %arg4: memref<1x32xf32, #tpu.memory_space<vmem>>, %arg5: memref<32x128xf32, #tpu.memory_space<vmem>>, %arg6: memref<1x128xf32, #tpu.memory_space<vmem>>, %arg7: memref<16x128xf32, #tpu.memory_space<vmem>>) attributes {dimension_semantics = [#tpu.dimension_semantics<parallel>, #tpu.dimension_semantics<parallel>], iteration_bounds = array<i64: 1, 1>, scalar_prefetch = 0 : i64, scratch_operands = 0 : i64, tpu.core_type = #tpu.core_type<tc>, window_params = [{transform_indices = @transform_0, window_bounds = array<i64: 16, 32>}, {pipeline_mode = #tpu.pipeline_mode<synchronous>, transform_indices = @transform_1, window_bounds = array<i64: 1, 32>}, {pipeline_mode = #tpu.pipeline_mode<synchronous>, transform_indices = @transform_2, window_bounds = array<i64: 1, 32>}, {transform_indices = @transform_3, window_bounds = array<i64: 32, 128>}, {transform_indices = @transform_4, window_bounds = array<i64: 1, 128>}, {transform_indices = @transform_5, window_bounds = array<i64: 16, 128>}]} {
    %c0 = arith.constant 0 : index
    %c0_0 = arith.constant 0 : index
    %0 = vector.load %arg2[%c0, %c0_0] : memref<16x32xf32, #tpu.memory_space<vmem>>, vector<16x32xf32>
    %cst = arith.constant dense<0.000000e+00> : vector<16xf32>
    %1 = vector.multi_reduction <add>, %0, %cst [1] : vector<16x32xf32> to vector<16xf32>
    %2 = vector.shape_cast %1 : vector<16xf32> to vector<16x1xf32>
    %cst_1 = arith.constant 3.200000e+01 : f32
    %3 = vector.broadcast %cst_1 : f32 to vector<16x1xf32>
    %4 = arith.divf %2, %3 : vector<16x1xf32>
    %5 = vector.broadcast %4 : vector<16x1xf32> to vector<16x32xf32>
    %6 = arith.subf %0, %5 : vector<16x32xf32>
    %7 = arith.mulf %6, %6 : vector<16x32xf32>
    %cst_2 = arith.constant dense<0.000000e+00> : vector<16xf32>
    %8 = vector.multi_reduction <add>, %7, %cst_2 [1] : vector<16x32xf32> to vector<16xf32>
    %9 = vector.shape_cast %8 : vector<16xf32> to vector<16x1xf32>
    %cst_3 = arith.constant 3.200000e+01 : f32
    %10 = vector.broadcast %cst_3 : f32 to vector<16x1xf32>
    %11 = arith.divf %9, %10 : vector<16x1xf32>
    %12 = vector.broadcast %4 : vector<16x1xf32> to vector<16x32xf32>
    %13 = arith.subf %0, %12 : vector<16x32xf32>
    %cst_4 = arith.constant 9.99999974E-6 : f32
    %14 = vector.broadcast %cst_4 : f32 to vector<16x1xf32>
    %15 = arith.addf %11, %14 : vector<16x1xf32>
    %16 = math.rsqrt %15 : vector<16x1xf32>
    %17 = vector.broadcast %16 : vector<16x1xf32> to vector<16x32xf32>
    %18 = arith.mulf %13, %17 : vector<16x32xf32>
    %c0_5 = arith.constant 0 : index
    %c0_6 = arith.constant 0 : index
    %19 = vector.load %arg3[%c0_5, %c0_6] : memref<1x32xf32, #tpu.memory_space<vmem>>, vector<1x32xf32>
    %20 = vector.broadcast %19 : vector<1x32xf32> to vector<16x32xf32>
    %21 = arith.mulf %18, %20 : vector<16x32xf32>
    %c0_7 = arith.constant 0 : index
    %c0_8 = arith.constant 0 : index
    %22 = vector.load %arg4[%c0_7, %c0_8] : memref<1x32xf32, #tpu.memory_space<vmem>>, vector<1x32xf32>
    %23 = vector.broadcast %22 : vector<1x32xf32> to vector<16x32xf32>
    %24 = arith.addf %21, %23 : vector<16x32xf32>
    %c0_9 = arith.constant 0 : index
    %c0_10 = arith.constant 0 : index
    %25 = vector.load %arg5[%c0_9, %c0_10] : memref<32x128xf32, #tpu.memory_space<vmem>>, vector<32x128xf32>
    %cst_11 = arith.constant dense<0.000000e+00> : vector<16x128xf32>
    %26 = tpu.matmul %24, %25, %cst_11 {dimension_numbers = #tpu.dot_dimension_numbers<[1], [0], [0], [1], [0, 0, 1, 1], [], []>} : vector<16x32xf32>, vector<32x128xf32>, vector<16x128xf32> -> vector<16x128xf32>
    %c0_12 = arith.constant 0 : index
    %c0_13 = arith.constant 0 : index
    %27 = vector.load %arg6[%c0_12, %c0_13] : memref<1x128xf32, #tpu.memory_space<vmem>>, vector<1x128xf32>
    %28 = vector.broadcast %27 : vector<1x128xf32> to vector<16x128xf32>
    %29 = arith.addf %26, %28 : vector<16x128xf32>
    %cst_14 = arith.constant 1.702000e+00 : f32
    %30 = vector.broadcast %cst_14 : f32 to vector<16x128xf32>
    %31 = arith.mulf %30, %29 : vector<16x128xf32>
    %32 = arith.negf %31 : vector<16x128xf32>
    %33 = math.exp %32 : vector<16x128xf32>
    %cst_15 = arith.constant 1.000000e+00 : f32
    %34 = vector.broadcast %cst_15 : f32 to vector<16x128xf32>
    %35 = arith.addf %34, %33 : vector<16x128xf32>
    %36 = arith.divf %34, %35 : vector<16x128xf32>
    %37 = arith.mulf %29, %36 : vector<16x128xf32>
    %c0_16 = arith.constant 0 : index
    %c0_17 = arith.constant 0 : index
    %38 = vector.load %arg7[%c0_16, %c0_17] : memref<16x128xf32, #tpu.memory_space<vmem>>, vector<16x128xf32>
    tpu.vector_store %arg7[%c0_16, %c0_17], %37 {strides = array<i32>} : memref<16x128xf32, #tpu.memory_space<vmem>>, vector<16x128xf32>,
    return
  }
  func.func @transform_0(%arg0: i32, %arg1: i32) -> (i32, i32) {
    %c0_i32 = arith.constant 0 : i32
    %c0_i32_0 = arith.constant 0 : i32
    return %arg0, %c0_i32 : i32, i32
  }
  func.func @transform_1(%arg0: i32, %arg1: i32) -> (i32, i32) {
    %c0_i32 = arith.constant 0 : i32
    %c0_i32_0 = arith.constant 0 : i32
    %c0_i32_1 = arith.constant 0 : i32
    return %c0_i32, %c0_i32_0 : i32, i32
  }
  func.func @transform_2(%arg0: i32, %arg1: i32) -> (i32, i32) {
    %c0_i32 = arith.constant 0 : i32
    %c0_i32_0 = arith.constant 0 : i32
    %c0_i32_1 = arith.constant 0 : i32
    return %c0_i32, %c0_i32_0 : i32, i32
  }
  func.func @transform_3(%arg0: i32, %arg1: i32) -> (i32, i32) {
    %c0_i32 = arith.constant 0 : i32
    %c0_i32_0 = arith.constant 0 : i32
    return %c0_i32, %arg1 : i32, i32
  }
  func.func @transform_4(%arg0: i32, %arg1: i32) -> (i32, i32) {
    %c0_i32 = arith.constant 0 : i32
    %c0_i32_0 = arith.constant 0 : i32
    return %c0_i32, %arg1 : i32, i32
  }
  func.func @transform_5(%arg0: i32, %arg1: i32) -> (i32, i32) {
    %c0_i32 = arith.constant 0 : i32
    return %arg0, %arg1 : i32, i32
  }
}

module attributes {stable_mosaic.version = 11 : i64} {
  func.func @_linear_res_kernel(%arg0: i32, %arg1: i32, %arg2: i32, %arg3: memref<16x128xf32, #tpu.memory_space<vmem>>, %arg4: memref<128x32xf32, #tpu.memory_space<vmem>>, %arg5: memref<1x32xf32, #tpu.memory_space<vmem>>, %arg6: memref<16x32xf32, #tpu.memory_space<vmem>>, %arg7: memref<16x32xf32, #tpu.memory_space<vmem>>, %arg8: memref<16x32xf32, #tpu.memory_space<vmem>>) attributes {dimension_semantics = [#tpu.dimension_semantics<parallel>, #tpu.dimension_semantics<parallel>, #tpu.dimension_semantics<arbitrary>], iteration_bounds = array<i64: 1, 1, 1>, scalar_prefetch = 0 : i64, scratch_operands = 1 : i64, tpu.core_type = #tpu.core_type<tc>, window_params = [{transform_indices = @transform_0, window_bounds = array<i64: 16, 128>}, {transform_indices = @transform_1, window_bounds = array<i64: 128, 32>}, {transform_indices = @transform_2, window_bounds = array<i64: 1, 32>}, {transform_indices = @transform_3, window_bounds = array<i64: 16, 32>}, {transform_indices = @transform_4, window_bounds = array<i64: 16, 32>}]} {
    %c0_i32 = arith.constant 0 : i32
    %0 = arith.cmpi eq, %arg2, %c0_i32 : i32
    %1 = arith.extui %0 : i1 to i32
    %c0_i32_0 = arith.constant 0 : i32
    %2 = arith.cmpi ne, %1, %c0_i32_0 : i32
    scf.if %2 {
      %cst_10 = arith.constant 0.000000e+00 : f32
      %12 = vector.broadcast %cst_10 : f32 to vector<16x32xf32>
      %c0_11 = arith.constant 0 : index
      %c0_12 = arith.constant 0 : index
      %13 = vector.load %arg8[%c0_11, %c0_12] : memref<16x32xf32, #tpu.memory_space<vmem>>, vector<16x32xf32>
      tpu.vector_store %arg8[%c0_11, %c0_12], %12 {strides = array<i32>} : memref<16x32xf32, #tpu.memory_space<vmem>>, vector<16x32xf32>,
    } else {
    }
    %c0 = arith.constant 0 : index
    %c0_1 = arith.constant 0 : index
    %3 = vector.load %arg8[%c0, %c0_1] : memref<16x32xf32, #tpu.memory_space<vmem>>, vector<16x32xf32>
    %c0_2 = arith.constant 0 : index
    %c0_3 = arith.constant 0 : index
    %4 = vector.load %arg3[%c0_2, %c0_3] : memref<16x128xf32, #tpu.memory_space<vmem>>, vector<16x128xf32>
    %c0_4 = arith.constant 0 : index
    %c0_5 = arith.constant 0 : index
    %5 = vector.load %arg4[%c0_4, %c0_5] : memref<128x32xf32, #tpu.memory_space<vmem>>, vector<128x32xf32>
    %cst = arith.constant dense<0.000000e+00> : vector<16x32xf32>
    %6 = tpu.matmul %4, %5, %cst {dimension_numbers = #tpu.dot_dimension_numbers<[1], [0], [0], [1], [0, 0, 1, 1], [], []>} : vector<16x128xf32>, vector<128x32xf32>, vector<16x32xf32> -> vector<16x32xf32>
    %7 = arith.addf %3, %6 : vector<16x32xf32>
    %c0_6 = arith.constant 0 : index
    %c0_7 = arith.constant 0 : index
    %8 = vector.load %arg8[%c0_6, %c0_7] : memref<16x32xf32, #tpu.memory_space<vmem>>, vector<16x32xf32>
    tpu.vector_store %arg8[%c0_6, %c0_7], %7 {strides = array<i32>} : memref<16x32xf32, #tpu.memory_space<vmem>>, vector<16x32xf32>,
    %c0_i32_8 = arith.constant 0 : i32
    %9 = arith.cmpi eq, %arg2, %c0_i32_8 : i32
    %10 = arith.extui %9 : i1 to i32
    %c0_i32_9 = arith.constant 0 : i32
    %11 = arith.cmpi ne, %10, %c0_i32_9 : i32
    scf.if %11 {
      %c0_10 = arith.constant 0 : index
      %c0_11 = arith.constant 0 : index
      %12 = vector.load %arg8[%c0_10, %c0_11] : memref<16x32xf32, #tpu.memory_space<vmem>>, vector<16x32xf32>
      %c0_12 = arith.constant 0 : index
      %c0_13 = arith.constant 0 : index
      %13 = vector.load %arg5[%c0_12, %c0_13] : memref<1x32xf32, #tpu.memory_space<vmem>>, vector<1x32xf32>
      %14 = vector.broadcast %13 : vector<1x32xf32> to vector<16x32xf32>
      %15 = arith.addf %12, %14 : vector<16x32xf32>
      %c0_14 = arith.constant 0 : index
      %c0_15 = arith.constant 0 : index
      %16 = vector.load %arg6[%c0_14, %c0_15] : memref<16x32xf32, #tpu.memory_space<vmem>>, vector<16x32xf32>
      %17 = arith.addf %15, %16 : vector<16x32xf32>
      %c0_16 = arith.constant 0 : index
      %c0_17 = arith.constant 0 : index
      %18 = vector.load %arg7[%c0_16, %c0_17] : memref<16x32xf32, #tpu.memory_space<vmem>>, vector<16x32xf32>
      tpu.vector_store %arg7[%c0_16, %c0_17], %17 {strides = array<i32>} : memref<16x32xf32, #tpu.memory_space<vmem>>, vector<16x32xf32>,
    } else {
    }
    return
  }
  func.func @transform_0(%arg0: i32, %arg1: i32, %arg2: i32) -> (i32, i32) {
    %c0_i32 = arith.constant 0 : i32
    return %arg0, %arg2 : i32, i32
  }
  func.func @transform_1(%arg0: i32, %arg1: i32, %arg2: i32) -> (i32, i32) {
    %c0_i32 = arith.constant 0 : i32
    return %arg2, %arg1 : i32, i32
  }
  func.func @transform_2(%arg0: i32, %arg1: i32, %arg2: i32) -> (i32, i32) {
    %c0_i32 = arith.constant 0 : i32
    %c0_i32_0 = arith.constant 0 : i32
    return %c0_i32, %arg1 : i32, i32
  }
  func.func @transform_3(%arg0: i32, %arg1: i32, %arg2: i32) -> (i32, i32) {
    %c0_i32 = arith.constant 0 : i32
    return %arg0, %arg1 : i32, i32
  }
  func.func @transform_4(%arg0: i32, %arg1: i32, %arg2: i32) -> (i32, i32) {
    %c0_i32 = arith.constant 0 : i32
    return %arg0, %arg1 : i32, i32
  }
}

</mosaic_0001>

<llo_original>
// kernel: transformer_forward.12
$region0: #{transformer_forward.12}
  #allocation0 [shape = 'u32[]', space=smem, size = 0x4, offset = 0x4, fixed_abs, tag = 'smem constant byte address 0x4 - core index']
  #allocation1 [shape = 'u32[144,128]{1,0:T(1,128)}', space=vmem, size = 0x12000, scoped, tag = 'internal scratch']
  #allocation2 [shape = 'f32[16,32]{1,0:T(8,128)}', space=vmem, size = 0x2000, scoped, tag = 'scratch operand']
  %s0 = inlined_call_operand.vmem [shape: f32[16,32], index: 0, kind: input, shape index: {}]
  %s1 = inlined_call_operand.vmem [shape: f32[32,32], index: 1, kind: input, shape index: {}]
  %s2 = inlined_call_operand.vmem [shape: f32[1,32], index: 2, kind: input, shape index: {}]
  %s3 = inlined_call_operand.vmem [shape: f32[16,32], index: 3, kind: input, shape index: {}]
  %s4 = inlined_call_operand.vmem [shape: f32[16,32], index: 4, kind: output, shape index: {}]
  %s5 = sld [smem:[#allocation0]]
  $region34: #{transformer_forward.12} parent=0
    _
  %s7 = ssub.s32 1, %s5
  %s8 = scalar_select 0, %s7, %s5
  // Predicated region
  $region2: #{transformer_forward.12} parent=0 // pred_check
    _
  $region3: #{transformer_forward.12} parent=0 // pred_check_branch
    %10 = sbr.rel (0) target = $region5
  $region4: #{transformer_forward.12} parent=0 // pred_region
    _
  $region5: #{transformer_forward.12} parent=0 // pred_fallthru
    _
  // Predicated region
  $region6: #{transformer_forward.12} parent=0 // pred_check
    _
  $region7: #{transformer_forward.12} parent=0 // pred_check_branch
    %12 = sbr.rel (0) target = $region9
  $region8: #{transformer_forward.12} parent=0 // pred_region
    _
  $region9: #{transformer_forward.12} parent=0 // pred_fallthru
    _
  // Predicated region
  $region10: #{transformer_forward.12} parent=0 // pred_check
    _
  $region11: #{transformer_forward.12} parent=0 // pred_check_branch
    %14 = sbr.rel (0) target = $region13
  $region12: #{transformer_forward.12} parent=0 // pred_region
    _
  $region13: #{transformer_forward.12} parent=0 // pred_fallthru
    _
  // Predicated region
  $region14: #{transformer_forward.12} parent=0 // pred_check
    _
  $region15: #{transformer_forward.12} parent=0 // pred_check_branch
    %16 = sbr.rel (0) target = $region17
  $region16: #{transformer_forward.12} parent=0 // pred_region
    _
  $region17: #{transformer_forward.12} parent=0 // pred_fallthru
    _
  %p17 = scmp.eq.s32.totalorder 0, 0
  // Predicated region
  $region18: #{transformer_forward.12} parent=0 // pred_check
    %p18 = pneg %p17
  $region19: #{transformer_forward.12} parent=0 // pred_check_branch
    %20 = sbr.rel (%p18) target = $region21
  $region20: #{transformer_forward.12} parent=0 // pred_region
    %vm21 = vcmask 261120
    %22 = vst.msk [vmem:[#allocation2] sm:$0xff] %vm21, 0.0
    %23 = vst.msk [vmem:[#allocation2 + $0x8] sm:$0xff] %vm21, 0.0
  $region21: #{transformer_forward.12} parent=0 // pred_fallthru
    _
  %v24 = vld [vmem:[#allocation2] sm:$0xff]
  %v25 = vld [vmem:[#allocation2 + $0x8] sm:$0xff]
  %v26 = vld [vmem:[%s0] sm:$0xff]
  %v27 = vld [vmem:[%s0 + $0x8] sm:$0xff]
  %v28 = vld [vmem:[%s1] sm:$0xff]
  %v29 = vld [vmem:[%s1 + $0x8] sm:$0xff]
  %v30 = vld [vmem:[%s1 + $0x10] sm:$0xff]
  %v31 = vld [vmem:[%s1 + $0x18] sm:$0xff]
  %vm32 = vcmask 261120
  %v34 = vsel %vm32, %v26, 0
  %v37 = vsel %vm32, %v27, 0
  %39 = vmatprep.subr.mxu0 0.0
  %40 = vmatpush1.msra.mxu0 %v28
  %41 = vmatprep.subr.mxu0 0.0
  %42 = vmatpush1.msra.mxu0 %v29
  %43 = vmatprep.subr.mxu0 0.0
  %44 = vmatpush1.msra.mxu0 %v30
  %45 = vmatprep.subr.mxu0 0.0
  %46 = vmatpush1.msra.mxu0 %v31
  %47 = vmatprep.subr.mxu0 0.0
  %48 = vmatpush1.msra.mxu0 0.0
  %49 = vmatprep.subr.mxu0 0.0
  %50 = vmatpush1.msra.mxu0 0.0
  %51 = vmatprep.subr.mxu0 0.0
  %52 = vmatpush1.msra.mxu0 0.0
  %53 = vmatprep.subr.mxu0 0.0
  %54 = vmatpush1.msra.mxu0 0.0
  %55 = vmatprep.subr.mxu0 0.0
  %56 = vmatpush1.msra.mxu0 0.0
  %57 = vmatprep.subr.mxu0 0.0
  %58 = vmatpush1.msra.mxu0 0.0
  %59 = vmatprep.subr.mxu0 0.0
  %60 = vmatpush1.msra.mxu0 0.0
  %61 = vmatprep.subr.mxu0 0.0
  %62 = vmatpush1.msra.mxu0 0.0
  %63 = vmatprep.subr.mxu0 0.0
  %64 = vmatpush1.msra.mxu0 0.0
  %65 = vmatprep.subr.mxu0 0.0
  %66 = vmatpush1.msra.mxu0 0.0
  %67 = vmatprep.subr.mxu0 0.0
  %68 = vmatpush1.msra.mxu0 0.0
  %69 = vmatprep.subr.mxu0 0.0
  %70 = vmatpush1.msra.mxu0 0.0
  %71 = vmatprep.subr.mxu0 0.0
  %72 = vmatpush1.msra.mxu0 0.0
  %73 = vmatprep.subr.mxu0 0.0
  %74 = vmatpush1.msra.mxu0 0.0
  %75 = vmatprep.subr.mxu0 0.0
  %76 = vmatpush1.msra.mxu0 0.0
  %77 = vmatprep.subr.mxu0 0.0
  %78 = vmatpush1.msra.mxu0 0.0
  %79 = vmatprep.subr.mxu0 0.0
  %80 = vmatpush1.msra.mxu0 0.0
  %81 = vmatprep.subr.mxu0 0.0
  %82 = vmatpush1.msra.mxu0 0.0
  %83 = vmatprep.subr.mxu0 0.0
  %84 = vmatpush1.msra.mxu0 0.0
  %85 = vmatprep.subr.mxu0 0.0
  %86 = vmatpush1.msra.mxu0 0.0
  %87 = vmatprep.subr.mxu0 0.0
  %88 = vmatpush1.msra.mxu0 0.0
  %89 = vmatprep.subr.mxu0 0.0
  %90 = vmatpush1.msra.mxu0 0.0
  %91 = vmatprep.subr.mxu0 0.0
  %92 = vmatpush1.msra.mxu0 0.0
  %93 = vmatprep.subr.mxu0 0.0
  %94 = vmatpush1.msra.mxu0 0.0
  %95 = vmatprep.subr.mxu0 0.0
  %96 = vmatpush1.msra.mxu0 0.0
  %97 = vmatprep.subr.mxu0 0.0
  %98 = vmatpush1.msra.mxu0 0.0
  %99 = vmatprep.subr.mxu0 0.0
  %100 = vmatpush1.msra.mxu0 0.0
  %101 = vmatprep.subr.mxu0 0.0
  %102 = vmatpush1.msra.mxu0 0.0
  %103 = vmatprep.mubr.f32.mxu0 0.0
  %104 = vmatmul.mubr.f32.gmra.mrb[0].mxu0 %v34
  %v105 = vpop.f32.mrb[0].mxu0
  %v106 = vadd.f32 0.0, %v105
  %v107 = vpop.f32.mrb[0].mxu0
  %108 = vmatprep.mubr.f32.mxu0 0.0
  %109 = vmatmul.mubr.f32.gmra.mrb[0].mxu0 %v37
  %v110 = vpop.f32.mrb[0].mxu0
  %v111 = vadd.f32 0.0, %v110
  %v112 = vpop.f32.mrb[0].mxu0
  %113 = vdwg.mxu0
  %v114 = vadd.f32 %v24, %v106
  %v115 = vadd.f32 %v25, %v111
  %116 = vst.msk [vmem:[#allocation2] sm:$0xff] %vm32, %v114
  %117 = vst.msk [vmem:[#allocation2 + $0x8] sm:$0xff] %vm32, %v115
  // Predicated region
  $region22: #{transformer_forward.12} parent=0 // pred_check
    %p118 = pneg %p17
  $region23: #{transformer_forward.12} parent=0 // pred_check_branch
    %120 = sbr.rel (%p118) target = $region25
  $region24: #{transformer_forward.12} parent=0 // pred_region
    %v121 = vld [vmem:[#allocation2] sm:$0xff]
    %v122 = vld [vmem:[#allocation2 + $0x8] sm:$0xff]
    %v123 = vld [vmem:[%s2] sm:$0x1]
    %v125 = vlaneseq
    %v126 = vshrl.u32 %v125, 7
    %v127 = vsub.s32 0, %v126
    %v128 = vrot.slane %v123, %v127
    %v130 = vadd.f32 %v121, %v128
    %v131 = vadd.f32 %v122, %v128
    %v132 = vld [vmem:[%s3] sm:$0xff]
    %v133 = vld [vmem:[%s3 + $0x8] sm:$0xff]
    %v134 = vadd.f32 %v130, %v132
    %v135 = vadd.f32 %v131, %v133
    %136 = vst.msk [vmem:[%s4] sm:$0xff] %vm32, %v134
    %137 = vst.msk [vmem:[%s4 + $0x8] sm:$0xff] %vm32, %v135
  $region25: #{transformer_forward.12} parent=0 // pred_fallthru
    _
  // Predicated region
  $region26: #{transformer_forward.12} parent=0 // pred_check
    _
  $region27: #{transformer_forward.12} parent=0 // pred_check_branch
    %139 = sbr.rel (0) target = $region29
  $region28: #{transformer_forward.12} parent=0 // pred_region
    _
  $region29: #{transformer_forward.12} parent=0 // pred_fallthru
    _
  // Predicated region
  $region30: #{transformer_forward.12} parent=0 // pred_check
    _
  $region31: #{transformer_forward.12} parent=0 // pred_check_branch
    %141 = sbr.rel (0) target = $region33
  $region32: #{transformer_forward.12} parent=0 // pred_region
    _
  $region33: #{transformer_forward.12} parent=0 // pred_fallthru
    _

// kernel: transformer_forward.10
$region0: #{transformer_forward.10}
  #allocation0 [shape = 'u32[]', space=smem, size = 0x4, offset = 0x4, fixed_abs, tag = 'smem constant byte address 0x4 - core index']
  #allocation1 [shape = 'u32[144,128]{1,0:T(1,128)}', space=vmem, size = 0x12000, scoped, tag = 'internal scratch']
  %s0 = inlined_call_operand.vmem [shape: f32[16,32], index: 0, kind: input, shape index: {}]
  %s1 = inlined_call_operand.vmem [shape: f32[1,32], index: 1, kind: input, shape index: {}]
  %s2 = inlined_call_operand.vmem [shape: f32[1,32], index: 2, kind: input, shape index: {}]
  %s3 = inlined_call_operand.vmem [shape: f32[32,96], index: 3, kind: input, shape index: {}]
  %s4 = inlined_call_operand.vmem [shape: f32[1,96], index: 4, kind: input, shape index: {}]
  %s5 = inlined_call_operand.vmem [shape: f32[16,96], index: 5, kind: output, shape index: {}]
  %s6 = sld [smem:[#allocation0]]
  $region30: #{transformer_forward.10} parent=0
    _
  %s8 = ssub.s32 1, %s6
  %s9 = scalar_select 0, %s8, %s6
  // Predicated region
  $region2: #{transformer_forward.10} parent=0 // pred_check
    _
  $region3: #{transformer_forward.10} parent=0 // pred_check_branch
    %11 = sbr.rel (0) target = $region5
  $region4: #{transformer_forward.10} parent=0 // pred_region
    _
  $region5: #{transformer_forward.10} parent=0 // pred_fallthru
    _
  // Predicated region
  $region6: #{transformer_forward.10} parent=0 // pred_check
    _
  $region7: #{transformer_forward.10} parent=0 // pred_check_branch
    %13 = sbr.rel (0) target = $region9
  $region8: #{transformer_forward.10} parent=0 // pred_region
    _
  $region9: #{transformer_forward.10} parent=0 // pred_fallthru
    _
  // Predicated region
  $region10: #{transformer_forward.10} parent=0 // pred_check
    _
  $region11: #{transformer_forward.10} parent=0 // pred_check_branch
    %15 = sbr.rel (0) target = $region13
  $region12: #{transformer_forward.10} parent=0 // pred_region
    _
  $region13: #{transformer_forward.10} parent=0 // pred_fallthru
    _
  // Predicated region
  $region14: #{transformer_forward.10} parent=0 // pred_check
    _
  $region15: #{transformer_forward.10} parent=0 // pred_check_branch
    %17 = sbr.rel (0) target = $region17
  $region16: #{transformer_forward.10} parent=0 // pred_region
    _
  $region17: #{transformer_forward.10} parent=0 // pred_fallthru
    _
  // Predicated region
  $region18: #{transformer_forward.10} parent=0 // pred_check
    _
  $region19: #{transformer_forward.10} parent=0 // pred_check_branch
    %19 = sbr.rel (0) target = $region21
  $region20: #{transformer_forward.10} parent=0 // pred_region
    _
  $region21: #{transformer_forward.10} parent=0 // pred_fallthru
    _
  %v20 = vld [vmem:[%s0] sm:$0xff]
  %v21 = vld [vmem:[%s0 + $0x8] sm:$0xff]
  %vm22 = vcmask 261120
  %v23 = vsel %vm22, %v20, 0.0
  %24 = vadd.xlane.f32.xlu0 %v23
  %v25 = vpop.xlane.xlu0 %24
  %v26 = vsel %vm22, %v21, 0.0
  %27 = vadd.xlane.f32.xlu0 %v26
  %v28 = vpop.xlane.xlu0 %27
  %v29 = vrcp.pop 32.0
  %v30 = vmul.f32 %v25, %v29
  %v31 = vmul.f32 %v28, %v29
  %v32 = vsub.f32 %v20, %v30
  %v33 = vsub.f32 %v21, %v31
  %v34 = vmul.f32 %v32, %v32
  %v35 = vmul.f32 %v33, %v33
  %v36 = vsel %vm22, %v34, 0.0
  %37 = vadd.xlane.f32.xlu0 %v36
  %v38 = vpop.xlane.xlu0 %37
  %v39 = vsel %vm22, %v35, 0.0
  %40 = vadd.xlane.f32.xlu0 %v39
  %v41 = vpop.xlane.xlu0 %40
  %v42 = vmul.f32 %v38, %v29
  %v43 = vmul.f32 %v41, %v29
  %v44 = vadd.f32 %v42, 1e-05
  %v45 = vadd.f32 %v43, 1e-05
  %v46 = vrsqrt.pop %v44
  %v47 = vrsqrt.pop %v45
  %v48 = vmul.f32 %v32, %v46
  %v49 = vmul.f32 %v33, %v47
  %v50 = vld [vmem:[%s1] sm:$0x1]
  %v52 = vlaneseq
  %v53 = vshrl.u32 %v52, 7
  %v54 = vsub.s32 0, %v53
  %v55 = vrot.slane %v50, %v54
  %v57 = vmul.f32 %v48, %v55
  %v58 = vmul.f32 %v49, %v55
  %v59 = vld [vmem:[%s2] sm:$0x1]
  %v61 = vlaneseq
  %v62 = vshrl.u32 %v61, 7
  %v63 = vsub.s32 0, %v62
  %v64 = vrot.slane %v59, %v63
  %v66 = vadd.f32 %v57, %v64
  %v67 = vadd.f32 %v58, %v64
  %v68 = vld [vmem:[%s3] sm:$0xff]
  %v69 = vld [vmem:[%s3 + $0x8] sm:$0xff]
  %v70 = vld [vmem:[%s3 + $0x10] sm:$0xff]
  %v71 = vld [vmem:[%s3 + $0x18] sm:$0xff]
  %v72 = vld [vmem:[%s4] sm:$0x1]
  %v74 = vlaneseq
  %v75 = vshrl.u32 %v74, 7
  %v76 = vsub.s32 0, %v75
  %v77 = vrot.slane %v72, %v76
  %v80 = vsel %vm22, %v66, 0
  %v83 = vsel %vm22, %v67, 0
  %85 = vmatprep.subr.mxu0 0.0
  %86 = vmatpush1.msra.mxu0 %v68
  %87 = vmatprep.subr.mxu0 0.0
  %88 = vmatpush1.msra.mxu0 %v69
  %89 = vmatprep.subr.mxu0 0.0
  %90 = vmatpush1.msra.mxu0 %v70
  %91 = vmatprep.subr.mxu0 0.0
  %92 = vmatpush1.msra.mxu0 %v71
  %93 = vmatprep.subr.mxu0 0.0
  %94 = vmatpush1.msra.mxu0 0.0
  %95 = vmatprep.subr.mxu0 0.0
  %96 = vmatpush1.msra.mxu0 0.0
  %97 = vmatprep.subr.mxu0 0.0
  %98 = vmatpush1.msra.mxu0 0.0
  %99 = vmatprep.subr.mxu0 0.0
  %100 = vmatpush1.msra.mxu0 0.0
  %101 = vmatprep.subr.mxu0 0.0
  %102 = vmatpush1.msra.mxu0 0.0
  %103 = vmatprep.subr.mxu0 0.0
  %104 = vmatpush1.msra.mxu0 0.0
  %105 = vmatprep.subr.mxu0 0.0
  %106 = vmatpush1.msra.mxu0 0.0
  %107 = vmatprep.subr.mxu0 0.0
  %108 = vmatpush1.msra.mxu0 0.0
  %109 = vmatprep.subr.mxu0 0.0
  %110 = vmatpush1.msra.mxu0 0.0
  %111 = vmatprep.subr.mxu0 0.0
  %112 = vmatpush1.msra.mxu0 0.0
  %113 = vmatprep.subr.mxu0 0.0
  %114 = vmatpush1.msra.mxu0 0.0
  %115 = vmatprep.subr.mxu0 0.0
  %116 = vmatpush1.msra.mxu0 0.0
  %117 = vmatprep.subr.mxu0 0.0
  %118 = vmatpush1.msra.mxu0 0.0
  %119 = vmatprep.subr.mxu0 0.0
  %120 = vmatpush1.msra.mxu0 0.0
  %121 = vmatprep.subr.mxu0 0.0
  %122 = vmatpush1.msra.mxu0 0.0
  %123 = vmatprep.subr.mxu0 0.0
  %124 = vmatpush1.msra.mxu0 0.0
  %125 = vmatprep.subr.mxu0 0.0
  %126 = vmatpush1.msra.mxu0 0.0
  %127 = vmatprep.subr.mxu0 0.0
  %128 = vmatpush1.msra.mxu0 0.0
  %129 = vmatprep.subr.mxu0 0.0
  %130 = vmatpush1.msra.mxu0 0.0
  %131 = vmatprep.subr.mxu0 0.0
  %132 = vmatpush1.msra.mxu0 0.0
  %133 = vmatprep.subr.mxu0 0.0
  %134 = vmatpush1.msra.mxu0 0.0
  %135 = vmatprep.subr.mxu0 0.0
  %136 = vmatpush1.msra.mxu0 0.0
  %137 = vmatprep.subr.mxu0 0.0
  %138 = vmatpush1.msra.mxu0 0.0
  %139 = vmatprep.subr.mxu0 0.0
  %140 = vmatpush1.msra.mxu0 0.0
  %141 = vmatprep.subr.mxu0 0.0
  %142 = vmatpush1.msra.mxu0 0.0
  %143 = vmatprep.subr.mxu0 0.0
  %144 = vmatpush1.msra.mxu0 0.0
  %145 = vmatprep.subr.mxu0 0.0
  %146 = vmatpush1.msra.mxu0 0.0
  %147 = vmatprep.subr.mxu0 0.0
  %148 = vmatpush1.msra.mxu0 0.0
  %149 = vmatprep.mubr.f32.mxu0 0.0
  %150 = vmatmul.mubr.f32.gmra.mrb[0].mxu0 %v80
  %v151 = vpop.f32.mrb[0].mxu0
  %v152 = vadd.f32 %v77, %v151
  %v153 = vpop.f32.mrb[0].mxu0
  %154 = vmatprep.mubr.f32.mxu0 0.0
  %155 = vmatmul.mubr.f32.gmra.mrb[0].mxu0 %v83
  %v156 = vpop.f32.mrb[0].mxu0
  %v157 = vadd.f32 %v77, %v156
  %v158 = vpop.f32.mrb[0].mxu0
  %159 = vdwg.mxu0
  %vm160 = vcmask 785408
  %161 = vst.msk [vmem:[%s5] sm:$0xff] %vm160, %v152
  %162 = vst.msk [vmem:[%s5 + $0x8] sm:$0xff] %vm160, %v157
  // Predicated region
  $region22: #{transformer_forward.10} parent=0 // pred_check
    _
  $region23: #{transformer_forward.10} parent=0 // pred_check_branch
    %164 = sbr.rel (0) target = $region25
  $region24: #{transformer_forward.10} parent=0 // pred_region
    _
  $region25: #{transformer_forward.10} parent=0 // pred_fallthru
    _
  // Predicated region
  $region26: #{transformer_forward.10} parent=0 // pred_check
    _
  $region27: #{transformer_forward.10} parent=0 // pred_check_branch
    %166 = sbr.rel (0) target = $region29
  $region28: #{transformer_forward.10} parent=0 // pred_region
    _
  $region29: #{transformer_forward.10} parent=0 // pred_fallthru
    _

// kernel: transformer_forward.11
$region0: #{transformer_forward.11}
  #allocation0 [shape = 'u32[]', space=smem, size = 0x4, offset = 0x4, fixed_abs, tag = 'smem constant byte address 0x4 - core index']
  #allocation1 [shape = 'u32[144,128]{1,0:T(1,128)}', space=vmem, size = 0x12000, scoped, tag = 'internal scratch']
  %s0 = inlined_call_operand.vmem [shape: f32[2,8,96], index: 0, kind: input, shape index: {}]
  %s1 = inlined_call_operand.vmem [shape: f32[2,8,8], index: 1, kind: input, shape index: {}]
  %s2 = inlined_call_operand.vmem [shape: f32[2,8,32], index: 2, kind: output, shape index: {}]
  %s3 = sld [smem:[#allocation0]]
  $region41: #{transformer_forward.11} parent=0
    _
  %s5 = ssub.s32 1, %s3
  %s6 = scalar_select 0, %s5, %s3
  loop: start=0, step=1, limit=4
  $region2: #{transformer_forward.11} parent=0 // loop_pre_header
    _
  $region3: #{transformer_forward.11} parent=0 // loop_header
    %s8 = sphi 0, %s12
    %p9 = scmp.ge.s32.totalorder %s8, 4
    %s18 = sphi 0, %s20
    %s21 = sphi 0, %s18
    %s22 = sphi 0, %s21
    %s38 = sphi 0, %s22
    %s42 = sphi 0, %s42
    %s44 = sphi 0, %s42
    %s45 = sphi 0, %s44
    %s59 = sphi 0, %s45
    %s65 = sphi 0, %s67
    %s68 = sphi 0, %s65
    %s69 = sphi 0, %s68
    %s85 = sphi 0, %s69
  $region4: #{transformer_forward.11} parent=0 // loop_header_branch
    %11 = sbr.rel (%p9) target = $region8
  $region5: #{transformer_forward.11} parent=0 // loop_body
    %s13 = ssub.s32 %s8, 1
    %s14 = ssub.s32 %s8, 2
    %s15 = sadd.s32 %s8, 1
    %s16 = ssub.s32 %s8, %s15
    %p17 = scmp.eq.s32.totalorder %s16, 0
    %s19 = sadd.s32 %s18, 1
    %s20 = scalar_select %p17, %s18, %s19
    %p23 = pneg %p17
    %p24 = scmp.eq.s32.totalorder %s8, 1
    %p25 = por %p23, %p24
    %p26 = scmp.ne.s32.totalorder %s18, %s21
    %p27 = scmp.eq.s32.totalorder %s8, 0
    %p28 = por %p26, %p27
    %p29 = scmp.ne.s32.totalorder %s18, %s21
    %p30 = scmp.eq.s32.totalorder %s13, 1
    %p31 = por %p29, %p30
    %p32 = scmp.ne.s32.totalorder %s21, %s22
    %p33 = scmp.eq.s32.totalorder %s13, 0
    %p34 = por %p32, %p33
    %p35 = scmp.ne.s32.totalorder %s21, %s22
    %p36 = scmp.eq.s32.totalorder %s14, 1
    %p37 = por %p35, %p36
    %p39 = scmp.ne.s32.totalorder %s22, %s38
    %p40 = scmp.eq.s32.totalorder %s14, 0
    %p41 = por %p39, %p40
    %s43 = sadd.s32 %s42, 1
    %p46 = scmp.eq.s32.totalorder %s8, 1
    %p47 = scmp.ne.s32.totalorder %s42, %s44
    %p48 = scmp.eq.s32.totalorder %s8, 0
    %p49 = por %p47, %p48
    %p50 = scmp.ne.s32.totalorder %s42, %s44
    %p51 = scmp.eq.s32.totalorder %s13, 1
    %p52 = por %p50, %p51
    %p53 = scmp.ne.s32.totalorder %s44, %s45
    %p54 = scmp.eq.s32.totalorder %s13, 0
    %p55 = por %p53, %p54
    %p56 = scmp.ne.s32.totalorder %s44, %s45
    %p57 = scmp.eq.s32.totalorder %s14, 1
    %p58 = por %p56, %p57
    %p60 = scmp.ne.s32.totalorder %s45, %s59
    %p61 = scmp.eq.s32.totalorder %s14, 0
    %p62 = por %p60, %p61
    %s63 = ssub.s32 %s8, %s15
    %p64 = scmp.eq.s32.totalorder %s63, 0
    %s66 = sadd.s32 %s65, 1
    %s67 = scalar_select %p64, %s65, %s66
    %p70 = pneg %p64
    %p71 = scmp.eq.s32.totalorder %s8, 1
    %p72 = por %p70, %p71
    %p73 = scmp.ne.s32.totalorder %s65, %s68
    %p74 = scmp.eq.s32.totalorder %s8, 0
    %p75 = por %p73, %p74
    %p76 = scmp.ne.s32.totalorder %s65, %s68
    %p77 = scmp.eq.s32.totalorder %s13, 1
    %p78 = por %p76, %p77
    %p79 = scmp.ne.s32.totalorder %s68, %s69
    %p80 = scmp.eq.s32.totalorder %s13, 0
    %p81 = por %p79, %p80
    %p82 = scmp.ne.s32.totalorder %s68, %s69
    %p83 = scmp.eq.s32.totalorder %s14, 1
    %p84 = por %p82, %p83
    %p86 = scmp.ne.s32.totalorder %s69, %s85
    %p87 = scmp.eq.s32.totalorder %s14, 0
    %p88 = por %p86, %p87
    %p89 = scmp.le.s32.totalorder 1, %s8
    %p90 = scmp.lt.s32.totalorder %s8, 3
    %p91 = pnand %p89, %p90
    %p92 = pneg %p91
    // Predicated region
    $region9: #{transformer_forward.11} parent=5 // pred_check
      _
    $region10: #{transformer_forward.11} parent=5 // pred_check_branch
      %94 = sbr.rel (%p91) target = $region12
    $region11: #{transformer_forward.11} parent=5 // pred_region
      %s95 = ssub.s32 %s8, 1
      // Predicated region
      $region13: #{transformer_forward.11} parent=11 // pred_check
        %p96 = pneg %p55
      $region14: #{transformer_forward.11} parent=11 // pred_check_branch
        %98 = sbr.rel (%p96) target = $region16
      $region15: #{transformer_forward.11} parent=11 // pred_region
        _
      $region16: #{transformer_forward.11} parent=11 // pred_fallthru
        _
    $region12: #{transformer_forward.11} parent=5 // pred_fallthru
      _
    %p99 = scmp.lt.s32.totalorder %s8, 2
    // Predicated region
    $region17: #{transformer_forward.11} parent=5 // pred_check
      %p100 = pneg %p99
    $region18: #{transformer_forward.11} parent=5 // pred_check_branch
      %102 = sbr.rel (%p100) target = $region20
    $region19: #{transformer_forward.11} parent=5 // pred_region
      // Predicated region
      $region21: #{transformer_forward.11} parent=19 // pred_check
        %p103 = pneg %p28
      $region22: #{transformer_forward.11} parent=19 // pred_check_branch
        %105 = sbr.rel (%p103) target = $region24
      $region23: #{transformer_forward.11} parent=19 // pred_region
        %p106 = scmp.lt.s32.totalorder %s8, 1
        %s107 = scalar_select %p106, %s8, 1
        %s108 = smul.addr %s107, 8
        %s109 = scalar_lea.vmem %s0, %s108
      $region24: #{transformer_forward.11} parent=19 // pred_fallthru
        _
    $region20: #{transformer_forward.11} parent=5 // pred_fallthru
      _
    %p110 = scmp.le.s32.totalorder 1, %s8
    %p111 = scmp.lt.s32.totalorder %s8, 3
    %p112 = pnand %p110, %p111
    %p113 = pneg %p112
    // Predicated region
    $region25: #{transformer_forward.11} parent=5 // pred_check
      _
    $region26: #{transformer_forward.11} parent=5 // pred_check_branch
      %115 = sbr.rel (%p112) target = $region28
    $region27: #{transformer_forward.11} parent=5 // pred_region
      %s116 = ssub.s32 %s8, 1
      %p117 = scmp.lt.s32.totalorder %s13, 1
      %s118 = scalar_select %p117, %s13, 1
      %s119 = smul.addr %s118, 8
      %s120 = scalar_lea.vmem %s0, %s119
      %p121 = pneg %p34
      %p122 = pneg %p31
      %p123 = pneg %p55
      %p124 = pneg %p52
      %p125 = pneg %p81
      %p126 = pneg %p78
      %p127 = scmp.lt.s32.totalorder %s13, 1
      %s128 = scalar_select %p127, %s13, 1
      %s129 = smul.addr %s128, 8
      %s130 = scalar_lea.vmem %s2, %s129
      %p131 = scmp.lt.s32.totalorder %s13, 1
      %s132 = scalar_select %p131, %s13, 1
      %s133 = smul.addr %s132, 8
      %s134 = scalar_lea.vmem %s0, %s133
      %p135 = scmp.lt.s32.totalorder %s13, 1
      %s136 = scalar_select %p135, %s13, 1
      %s137 = smul.addr %s136, 8
      %s138 = scalar_lea.vmem %s2, %s137
      %v139 = vld [vmem:[%s134] sm:$0xff]
      %s140 = smul.u32 %s13, 4
      %p141 = scmp.lt.s32.totalorder %s140, 0
      %s142 = ssub.s32 0, %s140
      %s143 = scalar_select %p141, %s142, %s140
      %s144 = sand.u32 %s143, 1
      %s145 = ssub.s32 0, %s144
      %s146 = scalar_select %p141, %s145, %s144
      %p147 = scmp.ne.s32.totalorder %s146, 0
      %p148 = scmp.lt.s32.totalorder %s146, 0
      %p149 = pnand %p148, %p147
      %p150 = pneg %p149
      %s151 = sadd.s32 %s146, 2
      %s152 = scalar_select %p150, %s151, %s146
      %s153 = smul.u32 %s152, 8
      %s154 = scalar_lea.vmem %s1, %s153
      %v155 = vld [vmem:[%s154] sm:$0xff]
      %157 = vrot.lane.b32.xlu0 %v139, 96
      %v158 = vpop.permute.xlu0 %157
      %vm159 = vcmask 64512
      %v160 = vsel %vm159, %v139, 0
      %v162 = vsel %vm159, %v158, 0
      %164 = vmatprep.subr.mxu0 0.0
      %165 = vmatpush1.xpose.msra.mxu0 %v162
      %166 = vmatprep.subr.mxu0 0.0
      %167 = vmatpush1.xpose.msra.mxu0 0.0
      %168 = vmatprep.subr.mxu0 0.0
      %169 = vmatpush1.xpose.msra.mxu0 0.0
      %170 = vmatprep.subr.mxu0 0.0
      %171 = vmatpush1.xpose.msra.mxu0 0.0
      %172 = vmatprep.subr.mxu0 0.0
      %173 = vmatpush1.xpose.msra.mxu0 0.0
      %174 = vmatprep.subr.mxu0 0.0
      %175 = vmatpush1.xpose.msra.mxu0 0.0
      %176 = vmatprep.subr.mxu0 0.0
      %177 = vmatpush1.xpose.msra.mxu0 0.0
      %178 = vmatprep.subr.mxu0 0.0
      %179 = vmatpush1.xpose.msra.mxu0 0.0
      %180 = vmatprep.subr.mxu0 0.0
      %181 = vmatpush1.xpose.msra.mxu0 0.0
      %182 = vmatprep.subr.mxu0 0.0
      %183 = vmatpush1.xpose.msra.mxu0 0.0
      %184 = vmatprep.subr.mxu0 0.0
      %185 = vmatpush1.xpose.msra.mxu0 0.0
      %186 = vmatprep.subr.mxu0 0.0
      %187 = vmatpush1.xpose.msra.mxu0 0.0
      %188 = vmatprep.subr.mxu0 0.0
      %189 = vmatpush1.xpose.msra.mxu0 0.0
      %190 = vmatprep.subr.mxu0 0.0
      %191 = vmatpush1.xpose.msra.mxu0 0.0
      %192 = vmatprep.subr.mxu0 0.0
      %193 = vmatpush1.xpose.msra.mxu0 0.0
      %194 = vmatprep.subr.mxu0 0.0
      %195 = vmatpush1.xpose.msra.mxu0 0.0
      %196 = vmatprep.subr.mxu0 0.0
      %197 = vmatpush1.xpose.msra.mxu0 0.0
      %198 = vmatprep.subr.mxu0 0.0
      %199 = vmatpush1.xpose.msra.mxu0 0.0
      %200 = vmatprep.subr.mxu0 0.0
      %201 = vmatpush1.xpose.msra.mxu0 0.0
      %202 = vmatprep.subr.mxu0 0.0
      %203 = vmatpush1.xpose.msra.mxu0 0.0
      %204 = vmatprep.subr.mxu0 0.0
      %205 = vmatpush1.xpose.msra.mxu0 0.0
      %206 = vmatprep.subr.mxu0 0.0
      %207 = vmatpush1.xpose.msra.mxu0 0.0
      %208 = vmatprep.subr.mxu0 0.0
      %209 = vmatpush1.xpose.msra.mxu0 0.0
      %210 = vmatprep.subr.mxu0 0.0
      %211 = vmatpush1.xpose.msra.mxu0 0.0
      %212 = vmatprep.subr.mxu0 0.0
      %213 = vmatpush1.xpose.msra.mxu0 0.0
      %214 = vmatprep.subr.mxu0 0.0
      %215 = vmatpush1.xpose.msra.mxu0 0.0
      %216 = vmatprep.subr.mxu0 0.0
      %217 = vmatpush1.xpose.msra.mxu0 0.0
      %218 = vmatprep.subr.mxu0 0.0
      %219 = vmatpush1.xpose.msra.mxu0 0.0
      %220 = vmatprep.subr.mxu0 0.0
      %221 = vmatpush1.xpose.msra.mxu0 0.0
      %222 = vmatprep.subr.mxu0 0.0
      %223 = vmatpush1.xpose.msra.mxu0 0.0
      %224 = vmatprep.subr.mxu0 0.0
      %225 = vmatpush1.xpose.msra.mxu0 0.0
      %226 = vmatprep.subr.mxu0 0.0
      %227 = vmatpush1.xpose.msra.mxu0 0.0
      %228 = vmatprep.mubr.f32.mxu0 0.0
      %229 = vmatmul.mubr.f32.gmra.mrb[0].mxu0 %v160
      %v230 = vpop.f32.mrb[0].mxu0
      %v231 = vadd.f32 %v155, %v230
      %v232 = vpop.f32.mrb[0].mxu0
      %233 = vdwg.mxu0
      %v234 = vsel %vm159, %v231, -inf
      %235 = vmax.xlane.f32.xlu0 %v234
      %v236 = vpop.xlane.xlu0 %235
      %v237 = vsub.f32 %v231, %v236
      %v238 = vmul.f32 %v237, 1.442695
      %v239 = vpow.pop %v238
      %v240 = vsel %vm159, %v239, 0.0
      %241 = vadd.xlane.f32.xlu0 %v240
      %v242 = vpop.xlane.xlu0 %241
      %v243 = vrcp.pop %v242
      %v244 = vmul.f32 %v239, %v243
      %245 = vrot.lane.b32.xlu0 %v139, 64
      %v246 = vpop.permute.xlu0 %245
      %v249 = vsel %vm159, %v244, 0
      %251 = vmatprep.subr.mxu0 0.0
      %252 = vmatpush1.msra.mxu0 %v246
      %253 = vmatprep.subr.mxu0 0.0
      %254 = vmatpush1.msra.mxu0 0.0
      %255 = vmatprep.subr.mxu0 0.0
      %256 = vmatpush1.msra.mxu0 0.0
      %257 = vmatprep.subr.mxu0 0.0
      %258 = vmatpush1.msra.mxu0 0.0
      %259 = vmatprep.subr.mxu0 0.0
      %260 = vmatpush1.msra.mxu0 0.0
      %261 = vmatprep.subr.mxu0 0.0
      %262 = vmatpush1.msra.mxu0 0.0
      %263 = vmatprep.subr.mxu0 0.0
      %264 = vmatpush1.msra.mxu0 0.0
      %265 = vmatprep.subr.mxu0 0.0
      %266 = vmatpush1.msra.mxu0 0.0
      %267 = vmatprep.subr.mxu0 0.0
      %268 = vmatpush1.msra.mxu0 0.0
      %269 = vmatprep.subr.mxu0 0.0
      %270 = vmatpush1.msra.mxu0 0.0
      %271 = vmatprep.subr.mxu0 0.0
      %272 = vmatpush1.msra.mxu0 0.0
      %273 = vmatprep.subr.mxu0 0.0
      %274 = vmatpush1.msra.mxu0 0.0
      %275 = vmatprep.subr.mxu0 0.0
      %276 = vmatpush1.msra.mxu0 0.0
      %277 = vmatprep.subr.mxu0 0.0
      %278 = vmatpush1.msra.mxu0 0.0
      %279 = vmatprep.subr.mxu0 0.0
      %280 = vmatpush1.msra.mxu0 0.0
      %281 = vmatprep.subr.mxu0 0.0
      %282 = vmatpush1.msra.mxu0 0.0
      %283 = vmatprep.subr.mxu0 0.0
      %284 = vmatpush1.msra.mxu0 0.0
      %285 = vmatprep.subr.mxu0 0.0
      %286 = vmatpush1.msra.mxu0 0.0
      %287 = vmatprep.subr.mxu0 0.0
      %288 = vmatpush1.msra.mxu0 0.0
      %289 = vmatprep.subr.mxu0 0.0
      %290 = vmatpush1.msra.mxu0 0.0
      %291 = vmatprep.subr.mxu0 0.0
      %292 = vmatpush1.msra.mxu0 0.0
      %293 = vmatprep.subr.mxu0 0.0
      %294 = vmatpush1.msra.mxu0 0.0
      %295 = vmatprep.subr.mxu0 0.0
      %296 = vmatpush1.msra.mxu0 0.0
      %297 = vmatprep.subr.mxu0 0.0
      %298 = vmatpush1.msra.mxu0 0.0
      %299 = vmatprep.subr.mxu0 0.0
      %300 = vmatpush1.msra.mxu0 0.0
      %301 = vmatprep.subr.mxu0 0.0
      %302 = vmatpush1.msra.mxu0 0.0
      %303 = vmatprep.subr.mxu0 0.0
      %304 = vmatpush1.msra.mxu0 0.0
      %305 = vmatprep.subr.mxu0 0.0
      %306 = vmatpush1.msra.mxu0 0.0
      %307 = vmatprep.subr.mxu0 0.0
      %308 = vmatpush1.msra.mxu0 0.0
      %309 = vmatprep.subr.mxu0 0.0
      %310 = vmatpush1.msra.mxu0 0.0
      %311 = vmatprep.subr.mxu0 0.0
      %312 = vmatpush1.msra.mxu0 0.0
      %313 = vmatprep.subr.mxu0 0.0
      %314 = vmatpush1.msra.mxu0 0.0
      %315 = vmatprep.mubr.f32.mxu0 0.0
      %316 = vmatmul.mubr.f32.gmra.mrb[0].mxu0 %v249
      %v317 = vpop.f32.mrb[0].mxu0
      %v318 = vadd.f32 0.0, %v317
      %v319 = vpop.f32.mrb[0].mxu0
      %320 = vdwg.mxu0
      %s321 = sadd.s32 %s140, 1
      %p322 = scmp.lt.s32.totalorder %s321, 0
      %s323 = ssub.s32 0, %s321
      %s324 = scalar_select %p322, %s323, %s321
      %s325 = sand.u32 %s324, 1
      %s326 = ssub.s32 0, %s325
      %s327 = scalar_select %p322, %s326, %s325
      %p328 = scmp.ne.s32.totalorder %s327, 0
      %p329 = scmp.lt.s32.totalorder %s327, 0
      %p330 = pnand %p329, %p328
      %p331 = pneg %p330
      %s332 = sadd.s32 %s327, 2
      %s333 = scalar_select %p331, %s332, %s327
      %s334 = smul.u32 %s333, 8
      %s335 = scalar_lea.vmem %s1, %s334
      %v336 = vld [vmem:[%s335] sm:$0xff]
      %337 = vrot.lane.b32.xlu0 %v139, 120
      %v338 = vpop.permute.xlu0 %337
      %339 = vrot.lane.b32.xlu0 %v139, 88
      %v340 = vpop.permute.xlu0 %339
      %v341 = vsel %vm159, %v338, 0
      %v343 = vsel %vm159, %v340, 0
      %345 = vmatprep.subr.mxu0 0.0
      %346 = vmatpush1.xpose.msra.mxu0 %v343
      %347 = vmatprep.subr.mxu0 0.0
      %348 = vmatpush1.xpose.msra.mxu0 0.0
      %349 = vmatprep.subr.mxu0 0.0
      %350 = vmatpush1.xpose.msra.mxu0 0.0
      %351 = vmatprep.subr.mxu0 0.0
      %352 = vmatpush1.xpose.msra.mxu0 0.0
      %353 = vmatprep.subr.mxu0 0.0
      %354 = vmatpush1.xpose.msra.mxu0 0.0
      %355 = vmatprep.subr.mxu0 0.0
      %356 = vmatpush1.xpose.msra.mxu0 0.0
      %357 = vmatprep.subr.mxu0 0.0
      %358 = vmatpush1.xpose.msra.mxu0 0.0
      %359 = vmatprep.subr.mxu0 0.0
      %360 = vmatpush1.xpose.msra.mxu0 0.0
      %361 = vmatprep.subr.mxu0 0.0
      %362 = vmatpush1.xpose.msra.mxu0 0.0
      %363 = vmatprep.subr.mxu0 0.0
      %364 = vmatpush1.xpose.msra.mxu0 0.0
      %365 = vmatprep.subr.mxu0 0.0
      %366 = vmatpush1.xpose.msra.mxu0 0.0
      %367 = vmatprep.subr.mxu0 0.0
      %368 = vmatpush1.xpose.msra.mxu0 0.0
      %369 = vmatprep.subr.mxu0 0.0
      %370 = vmatpush1.xpose.msra.mxu0 0.0
      %371 = vmatprep.subr.mxu0 0.0
      %372 = vmatpush1.xpose.msra.mxu0 0.0
      %373 = vmatprep.subr.mxu0 0.0
      %374 = vmatpush1.xpose.msra.mxu0 0.0
      %375 = vmatprep.subr.mxu0 0.0
      %376 = vmatpush1.xpose.msra.mxu0 0.0
      %377 = vmatprep.subr.mxu0 0.0
      %378 = vmatpush1.xpose.msra.mxu0 0.0
      %379 = vmatprep.subr.mxu0 0.0
      %380 = vmatpush1.xpose.msra.mxu0 0.0
      %381 = vmatprep.subr.mxu0 0.0
      %382 = vmatpush1.xpose.msra.mxu0 0.0
      %383 = vmatprep.subr.mxu0 0.0
      %384 = vmatpush1.xpose.msra.mxu0 0.0
      %385 = vmatprep.subr.mxu0 0.0
      %386 = vmatpush1.xpose.msra.mxu0 0.0
      %387 = vmatprep.subr.mxu0 0.0
      %388 = vmatpush1.xpose.msra.mxu0 0.0
      %389 = vmatprep.subr.mxu0 0.0
      %390 = vmatpush1.xpose.msra.mxu0 0.0
      %391 = vmatprep.subr.mxu0 0.0
      %392 = vmatpush1.xpose.msra.mxu0 0.0
      %393 = vmatprep.subr.mxu0 0.0
      %394 = vmatpush1.xpose.msra.mxu0 0.0
      %395 = vmatprep.subr.mxu0 0.0
      %396 = vmatpush1.xpose.msra.mxu0 0.0
      %397 = vmatprep.subr.mxu0 0.0
      %398 = vmatpush1.xpose.msra.mxu0 0.0
      %399 = vmatprep.subr.mxu0 0.0
      %400 = vmatpush1.xpose.msra.mxu0 0.0
      %401 = vmatprep.subr.mxu0 0.0
      %402 = vmatpush1.xpose.msra.mxu0 0.0
      %403 = vmatprep.subr.mxu0 0.0
      %404 = vmatpush1.xpose.msra.mxu0 0.0
      %405 = vmatprep.subr.mxu0 0.0
      %406 = vmatpush1.xpose.msra.mxu0 0.0
      %407 = vmatprep.subr.mxu0 0.0
      %408 = vmatpush1.xpose.msra.mxu0 0.0
      %409 = vmatprep.mubr.f32.mxu0 0.0
      %410 = vmatmul.mubr.f32.gmra.mrb[0].mxu0 %v341
      %v411 = vpop.f32.mrb[0].mxu0
      %v412 = vadd.f32 %v336, %v411
      %v413 = vpop.f32.mrb[0].mxu0
      %414 = vdwg.mxu0
      %v415 = vsel %vm159, %v412, -inf
      %416 = vmax.xlane.f32.xlu0 %v415
      %v417 = vpop.xlane.xlu0 %416
      %v418 = vsub.f32 %v412, %v417
      %v419 = vmul.f32 %v418, 1.442695
      %v420 = vpow.pop %v419
      %v421 = vsel %vm159, %v420, 0.0
      %422 = vadd.xlane.f32.xlu0 %v421
      %v423 = vpop.xlane.xlu0 %422
      %v424 = vrcp.pop %v423
      %v425 = vmul.f32 %v420, %v424
      %426 = vrot.lane.b32.xlu0 %v139, 56
      %v427 = vpop.permute.xlu0 %426
      %v430 = vsel %vm159, %v425, 0
      %432 = vmatprep.subr.mxu0 0.0
      %433 = vmatpush1.msra.mxu0 %v427
      %434 = vmatprep.subr.mxu0 0.0
      %435 = vmatpush1.msra.mxu0 0.0
      %436 = vmatprep.subr.mxu0 0.0
      %437 = vmatpush1.msra.mxu0 0.0
      %438 = vmatprep.subr.mxu0 0.0
      %439 = vmatpush1.msra.mxu0 0.0
      %440 = vmatprep.subr.mxu0 0.0
      %441 = vmatpush1.msra.mxu0 0.0
      %442 = vmatprep.subr.mxu0 0.0
      %443 = vmatpush1.msra.mxu0 0.0
      %444 = vmatprep.subr.mxu0 0.0
      %445 = vmatpush1.msra.mxu0 0.0
      %446 = vmatprep.subr.mxu0 0.0
      %447 = vmatpush1.msra.mxu0 0.0
      %448 = vmatprep.subr.mxu0 0.0
      %449 = vmatpush1.msra.mxu0 0.0
      %450 = vmatprep.subr.mxu0 0.0
      %451 = vmatpush1.msra.mxu0 0.0
      %452 = vmatprep.subr.mxu0 0.0
      %453 = vmatpush1.msra.mxu0 0.0
      %454 = vmatprep.subr.mxu0 0.0
      %455 = vmatpush1.msra.mxu0 0.0
      %456 = vmatprep.subr.mxu0 0.0
      %457 = vmatpush1.msra.mxu0 0.0
      %458 = vmatprep.subr.mxu0 0.0
      %459 = vmatpush1.msra.mxu0 0.0
      %460 = vmatprep.subr.mxu0 0.0
      %461 = vmatpush1.msra.mxu0 0.0
      %462 = vmatprep.subr.mxu0 0.0
      %463 = vmatpush1.msra.mxu0 0.0
      %464 = vmatprep.subr.mxu0 0.0
      %465 = vmatpush1.msra.mxu0 0.0
      %466 = vmatprep.subr.mxu0 0.0
      %467 = vmatpush1.msra.mxu0 0.0
      %468 = vmatprep.subr.mxu0 0.0
      %469 = vmatpush1.msra.mxu0 0.0
      %470 = vmatprep.subr.mxu0 0.0
      %471 = vmatpush1.msra.mxu0 0.0
      %472 = vmatprep.subr.mxu0 0.0
      %473 = vmatpush1.msra.mxu0 0.0
      %474 = vmatprep.subr.mxu0 0.0
      %475 = vmatpush1.msra.mxu0 0.0
      %476 = vmatprep.subr.mxu0 0.0
      %477 = vmatpush1.msra.mxu0 0.0
      %478 = vmatprep.subr.mxu0 0.0
      %479 = vmatpush1.msra.mxu0 0.0
      %480 = vmatprep.subr.mxu0 0.0
      %481 = vmatpush1.msra.mxu0 0.0
      %482 = vmatprep.subr.mxu0 0.0
      %483 = vmatpush1.msra.mxu0 0.0
      %484 = vmatprep.subr.mxu0 0.0
      %485 = vmatpush1.msra.mxu0 0.0
      %486 = vmatprep.subr.mxu0 0.0
      %487 = vmatpush1.msra.mxu0 0.0
      %488 = vmatprep.subr.mxu0 0.0
      %489 = vmatpush1.msra.mxu0 0.0
      %490 = vmatprep.subr.mxu0 0.0
      %491 = vmatpush1.msra.mxu0 0.0
      %492 = vmatprep.subr.mxu0 0.0
      %493 = vmatpush1.msra.mxu0 0.0
      %494 = vmatprep.subr.mxu0 0.0
      %495 = vmatpush1.msra.mxu0 0.0
      %496 = vmatprep.mubr.f32.mxu0 0.0
      %497 = vmatmul.mubr.f32.gmra.mrb[0].mxu0 %v430
      %v498 = vpop.f32.mrb[0].mxu0
      %v499 = vadd.f32 0.0, %v498
      %v500 = vpop.f32.mrb[0].mxu0
      %501 = vdwg.mxu0
      %s502 = sadd.s32 %s140, 2
      %p503 = scmp.lt.s32.totalorder %s502, 0
      %s504 = ssub.s32 0, %s502
      %s505 = scalar_select %p503, %s504, %s502
      %s506 = sand.u32 %s505, 1
      %s507 = ssub.s32 0, %s506
      %s508 = scalar_select %p503, %s507, %s506
      %p509 = scmp.ne.s32.totalorder %s508, 0
      %p510 = scmp.lt.s32.totalorder %s508, 0
      %p511 = pnand %p510, %p509
      %p512 = pneg %p511
      %s513 = sadd.s32 %s508, 2
      %s514 = scalar_select %p512, %s513, %s508
      %s515 = smul.u32 %s514, 8
      %s516 = scalar_lea.vmem %s1, %s515
      %v517 = vld [vmem:[%s516] sm:$0xff]
      %518 = vrot.lane.b32.xlu0 %v139, 112
      %v519 = vpop.permute.xlu0 %518
      %520 = vrot.lane.b32.xlu0 %v139, 80
      %v521 = vpop.permute.xlu0 %520
      %v522 = vsel %vm159, %v519, 0
      %v524 = vsel %vm159, %v521, 0
      %526 = vmatprep.subr.mxu0 0.0
      %527 = vmatpush1.xpose.msra.mxu0 %v524
      %528 = vmatprep.subr.mxu0 0.0
      %529 = vmatpush1.xpose.msra.mxu0 0.0
      %530 = vmatprep.subr.mxu0 0.0
      %531 = vmatpush1.xpose.msra.mxu0 0.0
      %532 = vmatprep.subr.mxu0 0.0
      %533 = vmatpush1.xpose.msra.mxu0 0.0
      %534 = vmatprep.subr.mxu0 0.0
      %535 = vmatpush1.xpose.msra.mxu0 0.0
      %536 = vmatprep.subr.mxu0 0.0
      %537 = vmatpush1.xpose.msra.mxu0 0.0
      %538 = vmatprep.subr.mxu0 0.0
      %539 = vmatpush1.xpose.msra.mxu0 0.0
      %540 = vmatprep.subr.mxu0 0.0
      %541 = vmatpush1.xpose.msra.mxu0 0.0
      %542 = vmatprep.subr.mxu0 0.0
      %543 = vmatpush1.xpose.msra.mxu0 0.0
      %544 = vmatprep.subr.mxu0 0.0
      %545 = vmatpush1.xpose.msra.mxu0 0.0
      %546 = vmatprep.subr.mxu0 0.0
      %547 = vmatpush1.xpose.msra.mxu0 0.0
      %548 = vmatprep.subr.mxu0 0.0
      %549 = vmatpush1.xpose.msra.mxu0 0.0
      %550 = vmatprep.subr.mxu0 0.0
      %551 = vmatpush1.xpose.msra.mxu0 0.0
      %552 = vmatprep.subr.mxu0 0.0
      %553 = vmatpush1.xpose.msra.mxu0 0.0
      %554 = vmatprep.subr.mxu0 0.0
      %555 = vmatpush1.xpose.msra.mxu0 0.0
      %556 = vmatprep.subr.mxu0 0.0
      %557 = vmatpush1.xpose.msra.mxu0 0.0
      %558 = vmatprep.subr.mxu0 0.0
      %559 = vmatpush1.xpose.msra.mxu0 0.0
      %560 = vmatprep.subr.mxu0 0.0
      %561 = vmatpush1.xpose.msra.mxu0 0.0
      %562 = vmatprep.subr.mxu0 0.0
      %563 = vmatpush1.xpose.msra.mxu0 0.0
      %564 = vmatprep.subr.mxu0 0.0
      %565 = vmatpush1.xpose.msra.mxu0 0.0
      %566 = vmatprep.subr.mxu0 0.0
      %567 = vmatpush1.xpose.msra.mxu0 0.0
      %568 = vmatprep.subr.mxu0 0.0
      %569 = vmatpush1.xpose.msra.mxu0 0.0
      %570 = vmatprep.subr.mxu0 0.0
      %571 = vmatpush1.xpose.msra.mxu0 0.0
      %572 = vmatprep.subr.mxu0 0.0
      %573 = vmatpush1.xpose.msra.mxu0 0.0
      %574 = vmatprep.subr.mxu0 0.0
      %575 = vmatpush1.xpose.msra.mxu0 0.0
      %576 = vmatprep.subr.mxu0 0.0
      %577 = vmatpush1.xpose.msra.mxu0 0.0
      %578 = vmatprep.subr.mxu0 0.0
      %579 = vmatpush1.xpose.msra.mxu0 0.0
      %580 = vmatprep.subr.mxu0 0.0
      %581 = vmatpush1.xpose.msra.mxu0 0.0
      %582 = vmatprep.subr.mxu0 0.0
      %583 = vmatpush1.xpose.msra.mxu0 0.0
      %584 = vmatprep.subr.mxu0 0.0
      %585 = vmatpush1.xpose.msra.mxu0 0.0
      %586 = vmatprep.subr.mxu0 0.0
      %587 = vmatpush1.xpose.msra.mxu0 0.0
      %588 = vmatprep.subr.mxu0 0.0
      %589 = vmatpush1.xpose.msra.mxu0 0.0
      %590 = vmatprep.mubr.f32.mxu0 0.0
      %591 = vmatmul.mubr.f32.gmra.mrb[0].mxu0 %v522
      %v592 = vpop.f32.mrb[0].mxu0
      %v593 = vadd.f32 %v517, %v592
      %v594 = vpop.f32.mrb[0].mxu0
      %595 = vdwg.mxu0
      %v596 = vsel %vm159, %v593, -inf
      %597 = vmax.xlane.f32.xlu0 %v596
      %v598 = vpop.xlane.xlu0 %597
      %v599 = vsub.f32 %v593, %v598
      %v600 = vmul.f32 %v599, 1.442695
      %v601 = vpow.pop %v600
      %v602 = vsel %vm159, %v601, 0.0
      %603 = vadd.xlane.f32.xlu0 %v602
      %v604 = vpop.xlane.xlu0 %603
      %v605 = vrcp.pop %v604
      %v606 = vmul.f32 %v601, %v605
      %607 = vrot.lane.b32.xlu0 %v139, 48
      %v608 = vpop.permute.xlu0 %607
      %v611 = vsel %vm159, %v606, 0
      %613 = vmatprep.subr.mxu0 0.0
      %614 = vmatpush1.msra.mxu0 %v608
      %615 = vmatprep.subr.mxu0 0.0
      %616 = vmatpush1.msra.mxu0 0.0
      %617 = vmatprep.subr.mxu0 0.0
      %618 = vmatpush1.msra.mxu0 0.0
      %619 = vmatprep.subr.mxu0 0.0
      %620 = vmatpush1.msra.mxu0 0.0
      %621 = vmatprep.subr.mxu0 0.0
      %622 = vmatpush1.msra.mxu0 0.0
      %623 = vmatprep.subr.mxu0 0.0
      %624 = vmatpush1.msra.mxu0 0.0
      %625 = vmatprep.subr.mxu0 0.0
      %626 = vmatpush1.msra.mxu0 0.0
      %627 = vmatprep.subr.mxu0 0.0
      %628 = vmatpush1.msra.mxu0 0.0
      %629 = vmatprep.subr.mxu0 0.0
      %630 = vmatpush1.msra.mxu0 0.0
      %631 = vmatprep.subr.mxu0 0.0
      %632 = vmatpush1.msra.mxu0 0.0
      %633 = vmatprep.subr.mxu0 0.0
      %634 = vmatpush1.msra.mxu0 0.0
      %635 = vmatprep.subr.mxu0 0.0
      %636 = vmatpush1.msra.mxu0 0.0
      %637 = vmatprep.subr.mxu0 0.0
      %638 = vmatpush1.msra.mxu0 0.0
      %639 = vmatprep.subr.mxu0 0.0
      %640 = vmatpush1.msra.mxu0 0.0
      %641 = vmatprep.subr.mxu0 0.0
      %642 = vmatpush1.msra.mxu0 0.0
      %643 = vmatprep.subr.mxu0 0.0
      %644 = vmatpush1.msra.mxu0 0.0
      %645 = vmatprep.subr.mxu0 0.0
      %646 = vmatpush1.msra.mxu0 0.0
      %647 = vmatprep.subr.mxu0 0.0
      %648 = vmatpush1.msra.mxu0 0.0
      %649 = vmatprep.subr.mxu0 0.0
      %650 = vmatpush1.msra.mxu0 0.0
      %651 = vmatprep.subr.mxu0 0.0
      %652 = vmatpush1.msra.mxu0 0.0
      %653 = vmatprep.subr.mxu0 0.0
      %654 = vmatpush1.msra.mxu0 0.0
      %655 = vmatprep.subr.mxu0 0.0
      %656 = vmatpush1.msra.mxu0 0.0
      %657 = vmatprep.subr.mxu0 0.0
      %658 = vmatpush1.msra.mxu0 0.0
      %659 = vmatprep.subr.mxu0 0.0
      %660 = vmatpush1.msra.mxu0 0.0
      %661 = vmatprep.subr.mxu0 0.0
      %662 = vmatpush1.msra.mxu0 0.0
      %663 = vmatprep.subr.mxu0 0.0
      %664 = vmatpush1.msra.mxu0 0.0
      %665 = vmatprep.subr.mxu0 0.0
      %666 = vmatpush1.msra.mxu0 0.0
      %667 = vmatprep.subr.mxu0 0.0
      %668 = vmatpush1.msra.mxu0 0.0
      %669 = vmatprep.subr.mxu0 0.0
      %670 = vmatpush1.msra.mxu0 0.0
      %671 = vmatprep.subr.mxu0 0.0
      %672 = vmatpush1.msra.mxu0 0.0
      %673 = vmatprep.subr.mxu0 0.0
      %674 = vmatpush1.msra.mxu0 0.0
      %675 = vmatprep.subr.mxu0 0.0
      %676 = vmatpush1.msra.mxu0 0.0
      %677 = vmatprep.mubr.f32.mxu0 0.0
      %678 = vmatmul.mubr.f32.gmra.mrb[0].mxu0 %v611
      %v679 = vpop.f32.mrb[0].mxu0
      %v680 = vadd.f32 0.0, %v679
      %v681 = vpop.f32.mrb[0].mxu0
      %682 = vdwg.mxu0
      %s683 = sadd.s32 %s140, 3
      %p684 = scmp.lt.s32.totalorder %s683, 0
      %s685 = ssub.s32 0, %s683
      %s686 = scalar_select %p684, %s685, %s683
      %s687 = sand.u32 %s686, 1
      %s688 = ssub.s32 0, %s687
      %s689 = scalar_select %p684, %s688, %s687
      %p690 = scmp.ne.s32.totalorder %s689, 0
      %p691 = scmp.lt.s32.totalorder %s689, 0
      %p692 = pnand %p691, %p690
      %p693 = pneg %p692
      %s694 = sadd.s32 %s689, 2
      %s695 = scalar_select %p693, %s694, %s689
      %s696 = smul.u32 %s695, 8
      %s697 = scalar_lea.vmem %s1, %s696
      %v698 = vld [vmem:[%s697] sm:$0xff]
      %699 = vrot.lane.b32.xlu0 %v139, 104
      %v700 = vpop.permute.xlu0 %699
      %701 = vrot.lane.b32.xlu0 %v139, 72
      %v702 = vpop.permute.xlu0 %701
      %v703 = vsel %vm159, %v700, 0
      %v705 = vsel %vm159, %v702, 0
      %707 = vmatprep.subr.mxu0 0.0
      %708 = vmatpush1.xpose.msra.mxu0 %v705
      %709 = vmatprep.subr.mxu0 0.0
      %710 = vmatpush1.xpose.msra.mxu0 0.0
      %711 = vmatprep.subr.mxu0 0.0
      %712 = vmatpush1.xpose.msra.mxu0 0.0
      %713 = vmatprep.subr.mxu0 0.0
      %714 = vmatpush1.xpose.msra.mxu0 0.0
      %715 = vmatprep.subr.mxu0 0.0
      %716 = vmatpush1.xpose.msra.mxu0 0.0
      %717 = vmatprep.subr.mxu0 0.0
      %718 = vmatpush1.xpose.msra.mxu0 0.0
      %719 = vmatprep.subr.mxu0 0.0
      %720 = vmatpush1.xpose.msra.mxu0 0.0
      %721 = vmatprep.subr.mxu0 0.0
      %722 = vmatpush1.xpose.msra.mxu0 0.0
      %723 = vmatprep.subr.mxu0 0.0
      %724 = vmatpush1.xpose.msra.mxu0 0.0
      %725 = vmatprep.subr.mxu0 0.0
      %726 = vmatpush1.xpose.msra.mxu0 0.0
      %727 = vmatprep.subr.mxu0 0.0
      %728 = vmatpush1.xpose.msra.mxu0 0.0
      %729 = vmatprep.subr.mxu0 0.0
      %730 = vmatpush1.xpose.msra.mxu0 0.0
      %731 = vmatprep.subr.mxu0 0.0
      %732 = vmatpush1.xpose.msra.mxu0 0.0
      %733 = vmatprep.subr.mxu0 0.0
      %734 = vmatpush1.xpose.msra.mxu0 0.0
      %735 = vmatprep.subr.mxu0 0.0
      %736 = vmatpush1.xpose.msra.mxu0 0.0
      %737 = vmatprep.subr.mxu0 0.0
      %738 = vmatpush1.xpose.msra.mxu0 0.0
      %739 = vmatprep.subr.mxu0 0.0
      %740 = vmatpush1.xpose.msra.mxu0 0.0
      %741 = vmatprep.subr.mxu0 0.0
      %742 = vmatpush1.xpose.msra.mxu0 0.0
      %743 = vmatprep.subr.mxu0 0.0
      %744 = vmatpush1.xpose.msra.mxu0 0.0
      %745 = vmatprep.subr.mxu0 0.0
      %746 = vmatpush1.xpose.msra.mxu0 0.0
      %747 = vmatprep.subr.mxu0 0.0
      %748 = vmatpush1.xpose.msra.mxu0 0.0
      %749 = vmatprep.subr.mxu0 0.0
      %750 = vmatpush1.xpose.msra.mxu0 0.0
      %751 = vmatprep.subr.mxu0 0.0
      %752 = vmatpush1.xpose.msra.mxu0 0.0
      %753 = vmatprep.subr.mxu0 0.0
      %754 = vmatpush1.xpose.msra.mxu0 0.0
      %755 = vmatprep.subr.mxu0 0.0
      %756 = vmatpush1.xpose.msra.mxu0 0.0
      %757 = vmatprep.subr.mxu0 0.0
      %758 = vmatpush1.xpose.msra.mxu0 0.0
      %759 = vmatprep.subr.mxu0 0.0
      %760 = vmatpush1.xpose.msra.mxu0 0.0
      %761 = vmatprep.subr.mxu0 0.0
      %762 = vmatpush1.xpose.msra.mxu0 0.0
      %763 = vmatprep.subr.mxu0 0.0
      %764 = vmatpush1.xpose.msra.mxu0 0.0
      %765 = vmatprep.subr.mxu0 0.0
      %766 = vmatpush1.xpose.msra.mxu0 0.0
      %767 = vmatprep.subr.mxu0 0.0
      %768 = vmatpush1.xpose.msra.mxu0 0.0
      %769 = vmatprep.subr.mxu0 0.0
      %770 = vmatpush1.xpose.msra.mxu0 0.0
      %771 = vmatprep.mubr.f32.mxu0 0.0
      %772 = vmatmul.mubr.f32.gmra.mrb[0].mxu0 %v703
      %v773 = vpop.f32.mrb[0].mxu0
      %v774 = vadd.f32 %v698, %v773
      %v775 = vpop.f32.mrb[0].mxu0
      %776 = vdwg.mxu0
      %v777 = vsel %vm159, %v774, -inf
      %778 = vmax.xlane.f32.xlu0 %v777
      %v779 = vpop.xlane.xlu0 %778
      %v780 = vsub.f32 %v774, %v779
      %v781 = vmul.f32 %v780, 1.442695
      %v782 = vpow.pop %v781
      %v783 = vsel %vm159, %v782, 0.0
      %784 = vadd.xlane.f32.xlu0 %v783
      %v785 = vpop.xlane.xlu0 %784
      %v786 = vrcp.pop %v785
      %v787 = vmul.f32 %v782, %v786
      %788 = vrot.lane.b32.xlu0 %v139, 40
      %v789 = vpop.permute.xlu0 %788
      %v792 = vsel %vm159, %v787, 0
      %794 = vmatprep.subr.mxu0 0.0
      %795 = vmatpush1.msra.mxu0 %v789
      %796 = vmatprep.subr.mxu0 0.0
      %797 = vmatpush1.msra.mxu0 0.0
      %798 = vmatprep.subr.mxu0 0.0
      %799 = vmatpush1.msra.mxu0 0.0
      %800 = vmatprep.subr.mxu0 0.0
      %801 = vmatpush1.msra.mxu0 0.0
      %802 = vmatprep.subr.mxu0 0.0
      %803 = vmatpush1.msra.mxu0 0.0
      %804 = vmatprep.subr.mxu0 0.0
      %805 = vmatpush1.msra.mxu0 0.0
      %806 = vmatprep.subr.mxu0 0.0
      %807 = vmatpush1.msra.mxu0 0.0
      %808 = vmatprep.subr.mxu0 0.0
      %809 = vmatpush1.msra.mxu0 0.0
      %810 = vmatprep.subr.mxu0 0.0
      %811 = vmatpush1.msra.mxu0 0.0
      %812 = vmatprep.subr.mxu0 0.0
      %813 = vmatpush1.msra.mxu0 0.0
      %814 = vmatprep.subr.mxu0 0.0
      %815 = vmatpush1.msra.mxu0 0.0
      %816 = vmatprep.subr.mxu0 0.0
      %817 = vmatpush1.msra.mxu0 0.0
      %818 = vmatprep.subr.mxu0 0.0
      %819 = vmatpush1.msra.mxu0 0.0
      %820 = vmatprep.subr.mxu0 0.0
      %821 = vmatpush1.msra.mxu0 0.0
      %822 = vmatprep.subr.mxu0 0.0
      %823 = vmatpush1.msra.mxu0 0.0
      %824 = vmatprep.subr.mxu0 0.0
      %825 = vmatpush1.msra.mxu0 0.0
      %826 = vmatprep.subr.mxu0 0.0
      %827 = vmatpush1.msra.mxu0 0.0
      %828 = vmatprep.subr.mxu0 0.0
      %829 = vmatpush1.msra.mxu0 0.0
      %830 = vmatprep.subr.mxu0 0.0
      %831 = vmatpush1.msra.mxu0 0.0
      %832 = vmatprep.subr.mxu0 0.0
      %833 = vmatpush1.msra.mxu0 0.0
      %834 = vmatprep.subr.mxu0 0.0
      %835 = vmatpush1.msra.mxu0 0.0
      %836 = vmatprep.subr.mxu0 0.0
      %837 = vmatpush1.msra.mxu0 0.0
      %838 = vmatprep.subr.mxu0 0.0
      %839 = vmatpush1.msra.mxu0 0.0
      %840 = vmatprep.subr.mxu0 0.0
      %841 = vmatpush1.msra.mxu0 0.0
      %842 = vmatprep.subr.mxu0 0.0
      %843 = vmatpush1.msra.mxu0 0.0
      %844 = vmatprep.subr.mxu0 0.0
      %845 = vmatpush1.msra.mxu0 0.0
      %846 = vmatprep.subr.mxu0 0.0
      %847 = vmatpush1.msra.mxu0 0.0
      %848 = vmatprep.subr.mxu0 0.0
      %849 = vmatpush1.msra.mxu0 0.0
      %850 = vmatprep.subr.mxu0 0.0
      %851 = vmatpush1.msra.mxu0 0.0
      %852 = vmatprep.subr.mxu0 0.0
      %853 = vmatpush1.msra.mxu0 0.0
      %854 = vmatprep.subr.mxu0 0.0
      %855 = vmatpush1.msra.mxu0 0.0
      %856 = vmatprep.subr.mxu0 0.0
      %857 = vmatpush1.msra.mxu0 0.0
      %858 = vmatprep.mubr.f32.mxu0 0.0
      %859 = vmatmul.mubr.f32.gmra.mrb[0].mxu0 %v792
      %v860 = vpop.f32.mrb[0].mxu0
      %v861 = vadd.f32 0.0, %v860
      %v862 = vpop.f32.mrb[0].mxu0
      %863 = vdwg.mxu0
      %865 = vrot.lane.b32.xlu0 %v499, 8
      %v866 = vpop.permute.xlu0 %865
      %869 = vrot.lane.b32.xlu0 %v680, 16
      %v870 = vpop.permute.xlu0 %869
      %873 = vrot.lane.b32.xlu0 %v861, 24
      %v874 = vpop.permute.xlu0 %873
      %v876 = vsel %vm159, %v318, %v866
      %vm877 = vcmask 130048
      %v878 = vsel %vm877, %v876, %v870
      %vm879 = vcmask 195584
      %v880 = vsel %vm879, %v878, %v874
      %vm881 = vcmask 261120
      %882 = vst.msk [vmem:[%s138] sm:$0xff] %vm881, %v880
      %p883 = scmp.lt.s32.totalorder %s13, 1
      %s884 = scalar_select %p883, %s13, 1
      %s885 = smul.addr %s884, 8
      %s886 = scalar_lea.vmem %s2, %s885
      // Predicated region
      $region29: #{transformer_forward.11} parent=27 // pred_check
        %p887 = pneg %p78
      $region30: #{transformer_forward.11} parent=27 // pred_check_branch
        %889 = sbr.rel (%p887) target = $region32
      $region31: #{transformer_forward.11} parent=27 // pred_region
        _
      $region32: #{transformer_forward.11} parent=27 // pred_fallthru
        _
    $region28: #{transformer_forward.11} parent=5 // pred_fallthru
      _
    %p890 = scmp.le.s32.totalorder 2, %s8
    // Predicated region
    $region33: #{transformer_forward.11} parent=5 // pred_check
      %p891 = pneg %p890
    $region34: #{transformer_forward.11} parent=5 // pred_check_branch
      %893 = sbr.rel (%p891) target = $region36
    $region35: #{transformer_forward.11} parent=5 // pred_region
      %s894 = ssub.s32 %s8, 2
      // Predicated region
      $region37: #{transformer_forward.11} parent=35 // pred_check
        %p895 = pneg %p84
      $region38: #{transformer_forward.11} parent=35 // pred_check_branch
        %897 = sbr.rel (%p895) target = $region40
      $region39: #{transformer_forward.11} parent=35 // pred_region
        %p898 = scmp.lt.s32.totalorder %s14, 1
        %s899 = scalar_select %p898, %s14, 1
        %s900 = smul.addr %s899, 8
        %s901 = scalar_lea.vmem %s2, %s900
      $region40: #{transformer_forward.11} parent=35 // pred_fallthru
        _
    $region36: #{transformer_forward.11} parent=5 // pred_fallthru
      _
  $region6: #{transformer_forward.11} parent=0 // loop_footer
    %s12 = sadd.s32 1, %s8
  $region7: #{transformer_forward.11} parent=0 // loop_footer_branch
    %7 = sbr.rel target = $region3
  $region8: #{transformer_forward.11} parent=0 // loop_exit
    _

// kernel: transformer_forward.13
$region0: #{transformer_forward.13}
  #allocation0 [shape = 'u32[]', space=smem, size = 0x4, offset = 0x4, fixed_abs, tag = 'smem constant byte address 0x4 - core index']
  #allocation1 [shape = 'u32[144,128]{1,0:T(1,128)}', space=vmem, size = 0x12000, scoped, tag = 'internal scratch']
  %s0 = inlined_call_operand.vmem [shape: f32[16,32], index: 0, kind: input, shape index: {}]
  %s1 = inlined_call_operand.vmem [shape: f32[1,32], index: 1, kind: input, shape index: {}]
  %s2 = inlined_call_operand.vmem [shape: f32[1,32], index: 2, kind: input, shape index: {}]
  %s3 = inlined_call_operand.vmem [shape: f32[32,128], index: 3, kind: input, shape index: {}]
  %s4 = inlined_call_operand.vmem [shape: f32[1,128], index: 4, kind: input, shape index: {}]
  %s5 = inlined_call_operand.vmem [shape: f32[16,128], index: 5, kind: output, shape index: {}]
  %s6 = sld [smem:[#allocation0]]
  $region30: #{transformer_forward.13} parent=0
    _
  %s8 = ssub.s32 1, %s6
  %s9 = scalar_select 0, %s8, %s6
  // Predicated region
  $region2: #{transformer_forward.13} parent=0 // pred_check
    _
  $region3: #{transformer_forward.13} parent=0 // pred_check_branch
    %11 = sbr.rel (0) target = $region5
  $region4: #{transformer_forward.13} parent=0 // pred_region
    _
  $region5: #{transformer_forward.13} parent=0 // pred_fallthru
    _
  // Predicated region
  $region6: #{transformer_forward.13} parent=0 // pred_check
    _
  $region7: #{transformer_forward.13} parent=0 // pred_check_branch
    %13 = sbr.rel (0) target = $region9
  $region8: #{transformer_forward.13} parent=0 // pred_region
    _
  $region9: #{transformer_forward.13} parent=0 // pred_fallthru
    _
  // Predicated region
  $region10: #{transformer_forward.13} parent=0 // pred_check
    _
  $region11: #{transformer_forward.13} parent=0 // pred_check_branch
    %15 = sbr.rel (0) target = $region13
  $region12: #{transformer_forward.13} parent=0 // pred_region
    _
  $region13: #{transformer_forward.13} parent=0 // pred_fallthru
    _
  // Predicated region
  $region14: #{transformer_forward.13} parent=0 // pred_check
    _
  $region15: #{transformer_forward.13} parent=0 // pred_check_branch
    %17 = sbr.rel (0) target = $region17
  $region16: #{transformer_forward.13} parent=0 // pred_region
    _
  $region17: #{transformer_forward.13} parent=0 // pred_fallthru
    _
  // Predicated region
  $region18: #{transformer_forward.13} parent=0 // pred_check
    _
  $region19: #{transformer_forward.13} parent=0 // pred_check_branch
    %19 = sbr.rel (0) target = $region21
  $region20: #{transformer_forward.13} parent=0 // pred_region
    _
  $region21: #{transformer_forward.13} parent=0 // pred_fallthru
    _
  %v20 = vld [vmem:[%s0] sm:$0xff]
  %v21 = vld [vmem:[%s0 + $0x8] sm:$0xff]
  %vm22 = vcmask 261120
  %v23 = vsel %vm22, %v20, 0.0
  %24 = vadd.xlane.f32.xlu0 %v23
  %v25 = vpop.xlane.xlu0 %24
  %v26 = vsel %vm22, %v21, 0.0
  %27 = vadd.xlane.f32.xlu0 %v26
  %v28 = vpop.xlane.xlu0 %27
  %v29 = vrcp.pop 32.0
  %v30 = vmul.f32 %v25, %v29
  %v31 = vmul.f32 %v28, %v29
  %v32 = vsub.f32 %v20, %v30
  %v33 = vsub.f32 %v21, %v31
  %v34 = vmul.f32 %v32, %v32
  %v35 = vmul.f32 %v33, %v33
  %v36 = vsel %vm22, %v34, 0.0
  %37 = vadd.xlane.f32.xlu0 %v36
  %v38 = vpop.xlane.xlu0 %37
  %v39 = vsel %vm22, %v35, 0.0
  %40 = vadd.xlane.f32.xlu0 %v39
  %v41 = vpop.xlane.xlu0 %40
  %v42 = vmul.f32 %v38, %v29
  %v43 = vmul.f32 %v41, %v29
  %v44 = vadd.f32 %v42, 1e-05
  %v45 = vadd.f32 %v43, 1e-05
  %v46 = vrsqrt.pop %v44
  %v47 = vrsqrt.pop %v45
  %v48 = vmul.f32 %v32, %v46
  %v49 = vmul.f32 %v33, %v47
  %v50 = vld [vmem:[%s1] sm:$0x1]
  %v52 = vlaneseq
  %v53 = vshrl.u32 %v52, 7
  %v54 = vsub.s32 0, %v53
  %v55 = vrot.slane %v50, %v54
  %v57 = vmul.f32 %v48, %v55
  %v58 = vmul.f32 %v49, %v55
  %v59 = vld [vmem:[%s2] sm:$0x1]
  %v61 = vlaneseq
  %v62 = vshrl.u32 %v61, 7
  %v63 = vsub.s32 0, %v62
  %v64 = vrot.slane %v59, %v63
  %v66 = vadd.f32 %v57, %v64
  %v67 = vadd.f32 %v58, %v64
  %v68 = vld [vmem:[%s3] sm:$0xff]
  %v69 = vld [vmem:[%s3 + $0x8] sm:$0xff]
  %v70 = vld [vmem:[%s3 + $0x10] sm:$0xff]
  %v71 = vld [vmem:[%s3 + $0x18] sm:$0xff]
  %v72 = vld [vmem:[%s4] sm:$0x1]
  %v74 = vlaneseq
  %v75 = vshrl.u32 %v74, 7
  %v76 = vsub.s32 0, %v75
  %v77 = vrot.slane %v72, %v76
  %v80 = vsel %vm22, %v66, 0
  %v83 = vsel %vm22, %v67, 0
  %85 = vmatprep.subr.mxu0 0.0
  %86 = vmatpush1.msra.mxu0 %v68
  %87 = vmatprep.subr.mxu0 0.0
  %88 = vmatpush1.msra.mxu0 %v69
  %89 = vmatprep.subr.mxu0 0.0
  %90 = vmatpush1.msra.mxu0 %v70
  %91 = vmatprep.subr.mxu0 0.0
  %92 = vmatpush1.msra.mxu0 %v71
  %93 = vmatprep.subr.mxu0 0.0
  %94 = vmatpush1.msra.mxu0 0.0
  %95 = vmatprep.subr.mxu0 0.0
  %96 = vmatpush1.msra.mxu0 0.0
  %97 = vmatprep.subr.mxu0 0.0
  %98 = vmatpush1.msra.mxu0 0.0
  %99 = vmatprep.subr.mxu0 0.0
  %100 = vmatpush1.msra.mxu0 0.0
  %101 = vmatprep.subr.mxu0 0.0
  %102 = vmatpush1.msra.mxu0 0.0
  %103 = vmatprep.subr.mxu0 0.0
  %104 = vmatpush1.msra.mxu0 0.0
  %105 = vmatprep.subr.mxu0 0.0
  %106 = vmatpush1.msra.mxu0 0.0
  %107 = vmatprep.subr.mxu0 0.0
  %108 = vmatpush1.msra.mxu0 0.0
  %109 = vmatprep.subr.mxu0 0.0
  %110 = vmatpush1.msra.mxu0 0.0
  %111 = vmatprep.subr.mxu0 0.0
  %112 = vmatpush1.msra.mxu0 0.0
  %113 = vmatprep.subr.mxu0 0.0
  %114 = vmatpush1.msra.mxu0 0.0
  %115 = vmatprep.subr.mxu0 0.0
  %116 = vmatpush1.msra.mxu0 0.0
  %117 = vmatprep.subr.mxu0 0.0
  %118 = vmatpush1.msra.mxu0 0.0
  %119 = vmatprep.subr.mxu0 0.0
  %120 = vmatpush1.msra.mxu0 0.0
  %121 = vmatprep.subr.mxu0 0.0
  %122 = vmatpush1.msra.mxu0 0.0
  %123 = vmatprep.subr.mxu0 0.0
  %124 = vmatpush1.msra.mxu0 0.0
  %125 = vmatprep.subr.mxu0 0.0
  %126 = vmatpush1.msra.mxu0 0.0
  %127 = vmatprep.subr.mxu0 0.0
  %128 = vmatpush1.msra.mxu0 0.0
  %129 = vmatprep.subr.mxu0 0.0
  %130 = vmatpush1.msra.mxu0 0.0
  %131 = vmatprep.subr.mxu0 0.0
  %132 = vmatpush1.msra.mxu0 0.0
  %133 = vmatprep.subr.mxu0 0.0
  %134 = vmatpush1.msra.mxu0 0.0
  %135 = vmatprep.subr.mxu0 0.0
  %136 = vmatpush1.msra.mxu0 0.0
  %137 = vmatprep.subr.mxu0 0.0
  %138 = vmatpush1.msra.mxu0 0.0
  %139 = vmatprep.subr.mxu0 0.0
  %140 = vmatpush1.msra.mxu0 0.0
  %141 = vmatprep.subr.mxu0 0.0
  %142 = vmatpush1.msra.mxu0 0.0
  %143 = vmatprep.subr.mxu0 0.0
  %144 = vmatpush1.msra.mxu0 0.0
  %145 = vmatprep.subr.mxu0 0.0
  %146 = vmatpush1.msra.mxu0 0.0
  %147 = vmatprep.subr.mxu0 0.0
  %148 = vmatpush1.msra.mxu0 0.0
  %149 = vmatprep.mubr.f32.mxu0 0.0
  %150 = vmatmul.mubr.f32.gmra.mrb[0].mxu0 %v80
  %v151 = vpop.f32.mrb[0].mxu0
  %v152 = vadd.f32 %v77, %v151
  %v153 = vpop.f32.mrb[0].mxu0
  %154 = vmatprep.mubr.f32.mxu0 0.0
  %155 = vmatmul.mubr.f32.gmra.mrb[0].mxu0 %v83
  %v156 = vpop.f32.mrb[0].mxu0
  %v157 = vadd.f32 %v77, %v156
  %v158 = vpop.f32.mrb[0].mxu0
  %159 = vdwg.mxu0
  %v160 = vmul.f32 %v152, 1.702
  %v161 = vmul.f32 %v157, 1.702
  %v162 = vxor.u32 %v160, 2147483648
  %v163 = vxor.u32 %v161, 2147483648
  %v164 = vmul.f32 %v162, 1.442695
  %v165 = vpow.pop %v164
  %v166 = vmul.f32 %v163, 1.442695
  %v167 = vpow.pop %v166
  %v168 = vadd.f32 %v165, 1.0
  %v169 = vadd.f32 %v167, 1.0
  %v170 = vrcp.pop %v168
  %v171 = vmul.f32 1.0, %v170
  %v172 = vrcp.pop %v169
  %v173 = vmul.f32 1.0, %v172
  %v174 = vmul.f32 %v152, %v171
  %v175 = vmul.f32 %v157, %v173
  %176 = vst [vmem:[%s5] sm:$0xff] %v174
  %177 = vst [vmem:[%s5 + $0x8] sm:$0xff] %v175
  // Predicated region
  $region22: #{transformer_forward.13} parent=0 // pred_check
    _
  $region23: #{transformer_forward.13} parent=0 // pred_check_branch
    %179 = sbr.rel (0) target = $region25
  $region24: #{transformer_forward.13} parent=0 // pred_region
    _
  $region25: #{transformer_forward.13} parent=0 // pred_fallthru
    _
  // Predicated region
  $region26: #{transformer_forward.13} parent=0 // pred_check
    _
  $region27: #{transformer_forward.13} parent=0 // pred_check_branch
    %181 = sbr.rel (0) target = $region29
  $region28: #{transformer_forward.13} parent=0 // pred_region
    _
  $region29: #{transformer_forward.13} parent=0 // pred_fallthru
    _

// kernel: transformer_forward.14
$region0: #{transformer_forward.14}
  #allocation0 [shape = 'u32[]', space=smem, size = 0x4, offset = 0x4, fixed_abs, tag = 'smem constant byte address 0x4 - core index']
  #allocation1 [shape = 'u32[144,128]{1,0:T(1,128)}', space=vmem, size = 0x12000, scoped, tag = 'internal scratch']
  #allocation2 [shape = 'f32[16,32]{1,0:T(8,128)}', space=vmem, size = 0x2000, scoped, tag = 'scratch operand']
  %s0 = inlined_call_operand.vmem [shape: f32[16,128], index: 0, kind: input, shape index: {}]
  %s1 = inlined_call_operand.vmem [shape: f32[128,32], index: 1, kind: input, shape index: {}]
  %s2 = inlined_call_operand.vmem [shape: f32[1,32], index: 2, kind: input, shape index: {}]
  %s3 = inlined_call_operand.vmem [shape: f32[16,32], index: 3, kind: input, shape index: {}]
  %s4 = inlined_call_operand.vmem [shape: f32[16,32], index: 4, kind: output, shape index: {}]
  %s5 = sld [smem:[#allocation0]]
  $region34: #{transformer_forward.14} parent=0
    _
  %s7 = ssub.s32 1, %s5
  %s8 = scalar_select 0, %s7, %s5
  // Predicated region
  $region2: #{transformer_forward.14} parent=0 // pred_check
    _
  $region3: #{transformer_forward.14} parent=0 // pred_check_branch
    %10 = sbr.rel (0) target = $region5
  $region4: #{transformer_forward.14} parent=0 // pred_region
    _
  $region5: #{transformer_forward.14} parent=0 // pred_fallthru
    _
  // Predicated region
  $region6: #{transformer_forward.14} parent=0 // pred_check
    _
  $region7: #{transformer_forward.14} parent=0 // pred_check_branch
    %12 = sbr.rel (0) target = $region9
  $region8: #{transformer_forward.14} parent=0 // pred_region
    _
  $region9: #{transformer_forward.14} parent=0 // pred_fallthru
    _
  // Predicated region
  $region10: #{transformer_forward.14} parent=0 // pred_check
    _
  $region11: #{transformer_forward.14} parent=0 // pred_check_branch
    %14 = sbr.rel (0) target = $region13
  $region12: #{transformer_forward.14} parent=0 // pred_region
    _
  $region13: #{transformer_forward.14} parent=0 // pred_fallthru
    _
  // Predicated region
  $region14: #{transformer_forward.14} parent=0 // pred_check
    _
  $region15: #{transformer_forward.14} parent=0 // pred_check_branch
    %16 = sbr.rel (0) target = $region17
  $region16: #{transformer_forward.14} parent=0 // pred_region
    _
  $region17: #{transformer_forward.14} parent=0 // pred_fallthru
    _
  %p17 = scmp.eq.s32.totalorder 0, 0
  // Predicated region
  $region18: #{transformer_forward.14} parent=0 // pred_check
    %p18 = pneg %p17
  $region19: #{transformer_forward.14} parent=0 // pred_check_branch
    %20 = sbr.rel (%p18) target = $region21
  $region20: #{transformer_forward.14} parent=0 // pred_region
    %vm21 = vcmask 261120
    %22 = vst.msk [vmem:[#allocation2] sm:$0xff] %vm21, 0.0
    %23 = vst.msk [vmem:[#allocation2 + $0x8] sm:$0xff] %vm21, 0.0
  $region21: #{transformer_forward.14} parent=0 // pred_fallthru
    _
  %v24 = vld [vmem:[#allocation2] sm:$0xff]
  %v25 = vld [vmem:[#allocation2 + $0x8] sm:$0xff]
  %v26 = vld [vmem:[%s0] sm:$0xff]
  %v27 = vld [vmem:[%s0 + $0x8] sm:$0xff]
  %v28 = vld [vmem:[%s1] sm:$0xff]
  %v29 = vld [vmem:[%s1 + $0x8] sm:$0xff]
  %v30 = vld [vmem:[%s1 + $0x10] sm:$0xff]
  %v31 = vld [vmem:[%s1 + $0x18] sm:$0xff]
  %v32 = vld [vmem:[%s1 + $0x20] sm:$0xff]
  %v33 = vld [vmem:[%s1 + $0x28] sm:$0xff]
  %v34 = vld [vmem:[%s1 + $0x30] sm:$0xff]
  %v35 = vld [vmem:[%s1 + $0x38] sm:$0xff]
  %v36 = vld [vmem:[%s1 + $0x40] sm:$0xff]
  %v37 = vld [vmem:[%s1 + $0x48] sm:$0xff]
  %v38 = vld [vmem:[%s1 + $0x50] sm:$0xff]
  %v39 = vld [vmem:[%s1 + $0x58] sm:$0xff]
  %v40 = vld [vmem:[%s1 + $0x60] sm:$0xff]
  %v41 = vld [vmem:[%s1 + $0x68] sm:$0xff]
  %v42 = vld [vmem:[%s1 + $0x70] sm:$0xff]
  %v43 = vld [vmem:[%s1 + $0x78] sm:$0xff]
  %44 = vmatprep.subr.mxu0 0.0
  %45 = vmatpush1.msra.mxu0 %v28
  %46 = vmatprep.subr.mxu0 0.0
  %47 = vmatpush1.msra.mxu0 %v29
  %48 = vmatprep.subr.mxu0 0.0
  %49 = vmatpush1.msra.mxu0 %v30
  %50 = vmatprep.subr.mxu0 0.0
  %51 = vmatpush1.msra.mxu0 %v31
  %52 = vmatprep.subr.mxu0 0.0
  %53 = vmatpush1.msra.mxu0 %v32
  %54 = vmatprep.subr.mxu0 0.0
  %55 = vmatpush1.msra.mxu0 %v33
  %56 = vmatprep.subr.mxu0 0.0
  %57 = vmatpush1.msra.mxu0 %v34
  %58 = vmatprep.subr.mxu0 0.0
  %59 = vmatpush1.msra.mxu0 %v35
  %60 = vmatprep.subr.mxu0 0.0
  %61 = vmatpush1.msra.mxu0 %v36
  %62 = vmatprep.subr.mxu0 0.0
  %63 = vmatpush1.msra.mxu0 %v37
  %64 = vmatprep.subr.mxu0 0.0
  %65 = vmatpush1.msra.mxu0 %v38
  %66 = vmatprep.subr.mxu0 0.0
  %67 = vmatpush1.msra.mxu0 %v39
  %68 = vmatprep.subr.mxu0 0.0
  %69 = vmatpush1.msra.mxu0 %v40
  %70 = vmatprep.subr.mxu0 0.0
  %71 = vmatpush1.msra.mxu0 %v41
  %72 = vmatprep.subr.mxu0 0.0
  %73 = vmatpush1.msra.mxu0 %v42
  %74 = vmatprep.subr.mxu0 0.0
  %75 = vmatpush1.msra.mxu0 %v43
  %76 = vmatprep.subr.mxu0 0.0
  %77 = vmatpush1.msra.mxu0 0.0
  %78 = vmatprep.subr.mxu0 0.0
  %79 = vmatpush1.msra.mxu0 0.0
  %80 = vmatprep.subr.mxu0 0.0
  %81 = vmatpush1.msra.mxu0 0.0
  %82 = vmatprep.subr.mxu0 0.0
  %83 = vmatpush1.msra.mxu0 0.0
  %84 = vmatprep.subr.mxu0 0.0
  %85 = vmatpush1.msra.mxu0 0.0
  %86 = vmatprep.subr.mxu0 0.0
  %87 = vmatpush1.msra.mxu0 0.0
  %88 = vmatprep.subr.mxu0 0.0
  %89 = vmatpush1.msra.mxu0 0.0
  %90 = vmatprep.subr.mxu0 0.0
  %91 = vmatpush1.msra.mxu0 0.0
  %92 = vmatprep.subr.mxu0 0.0
  %93 = vmatpush1.msra.mxu0 0.0
  %94 = vmatprep.subr.mxu0 0.0
  %95 = vmatpush1.msra.mxu0 0.0
  %96 = vmatprep.subr.mxu0 0.0
  %97 = vmatpush1.msra.mxu0 0.0
  %98 = vmatprep.subr.mxu0 0.0
  %99 = vmatpush1.msra.mxu0 0.0
  %100 = vmatprep.subr.mxu0 0.0
  %101 = vmatpush1.msra.mxu0 0.0
  %102 = vmatprep.subr.mxu0 0.0
  %103 = vmatpush1.msra.mxu0 0.0
  %104 = vmatprep.subr.mxu0 0.0
  %105 = vmatpush1.msra.mxu0 0.0
  %106 = vmatprep.subr.mxu0 0.0
  %107 = vmatpush1.msra.mxu0 0.0
  %108 = vmatprep.mubr.f32.mxu0 0.0
  %109 = vmatmul.mubr.f32.gmra.mrb[0].mxu0 %v26
  %v110 = vpop.f32.mrb[0].mxu0
  %v111 = vadd.f32 0.0, %v110
  %v112 = vpop.f32.mrb[0].mxu0
  %113 = vmatprep.mubr.f32.mxu0 0.0
  %114 = vmatmul.mubr.f32.gmra.mrb[0].mxu0 %v27
  %v115 = vpop.f32.mrb[0].mxu0
  %v116 = vadd.f32 0.0, %v115
  %v117 = vpop.f32.mrb[0].mxu0
  %118 = vdwg.mxu0
  %v119 = vadd.f32 %v24, %v111
  %v120 = vadd.f32 %v25, %v116
  %vm121 = vcmask 261120
  %122 = vst.msk [vmem:[#allocation2] sm:$0xff] %vm121, %v119
  %123 = vst.msk [vmem:[#allocation2 + $0x8] sm:$0xff] %vm121, %v120
  // Predicated region
  $region22: #{transformer_forward.14} parent=0 // pred_check
    %p124 = pneg %p17
  $region23: #{transformer_forward.14} parent=0 // pred_check_branch
    %126 = sbr.rel (%p124) target = $region25
  $region24: #{transformer_forward.14} parent=0 // pred_region
    %v127 = vld [vmem:[#allocation2] sm:$0xff]
    %v128 = vld [vmem:[#allocation2 + $0x8] sm:$0xff]
    %v129 = vld [vmem:[%s2] sm:$0x1]
    %v131 = vlaneseq
    %v132 = vshrl.u32 %v131, 7
    %v133 = vsub.s32 0, %v132
    %v134 = vrot.slane %v129, %v133
    %v136 = vadd.f32 %v127, %v134
    %v137 = vadd.f32 %v128, %v134
    %v138 = vld [vmem:[%s3] sm:$0xff]
    %v139 = vld [vmem:[%s3 + $0x8] sm:$0xff]
    %v140 = vadd.f32 %v136, %v138
    %v141 = vadd.f32 %v137, %v139
    %142 = vst.msk [vmem:[%s4] sm:$0xff] %vm121, %v140
    %143 = vst.msk [vmem:[%s4 + $0x8] sm:$0xff] %vm121, %v141
  $region25: #{transformer_forward.14} parent=0 // pred_fallthru
    _
  // Predicated region
  $region26: #{transformer_forward.14} parent=0 // pred_check
    _
  $region27: #{transformer_forward.14} parent=0 // pred_check_branch
    %145 = sbr.rel (0) target = $region29
  $region28: #{transformer_forward.14} parent=0 // pred_region
    _
  $region29: #{transformer_forward.14} parent=0 // pred_fallthru
    _
  // Predicated region
  $region30: #{transformer_forward.14} parent=0 // pred_check
    _
  $region31: #{transformer_forward.14} parent=0 // pred_check_branch
    %147 = sbr.rel (0) target = $region33
  $region32: #{transformer_forward.14} parent=0 // pred_region
    _
  $region33: #{transformer_forward.14} parent=0 // pred_fallthru
    _

</llo_original>
